<compile_context>
chip_gen: v6e
topology: v6e:2x2x1
jax: 0.10.0
libtpu: 0.0.40
codegen_flags: <defaults>
</compile_context>

<pallas_src>
import functools

import jax
import jax.numpy as jnp
import numpy as np
from jax import lax
from jax.experimental import pallas as pl
from jax.experimental.pallas import tpu as pltpu

SELU_ALPHA = 1.6732632423543772848170429916717
SELU_SCALE = 1.0507009873554804934193349852946


def _selu(v):
    # exp() argument clamped to <= 0 so the (masked) positive branch can't overflow.
    return SELU_SCALE * jnp.where(
        v > 0, v, SELU_ALPHA * (jnp.exp(jnp.minimum(v, 0.0)) - 1.0))


def gru_decoder_kernel(gi_ref, wh_ref, bh_ref,
                       w1_ref, b1_ref, w2_ref, b2_ref, w3_ref, b3_ref,
                       o_ref, *hs_refs, hidden_dim, seq_len, batch):
    """Single invocation: full GRU recurrence + batched 3-layer SELU head.

    gi_ref : (T, B, 3H)  precomputed input projection x@Wi + b_i (all time steps)
    wh_ref : (H, 3H), bh_ref : (1, 3H)
    w1/b1, w2/b2, w3/b3 : reconstruction head weights
    o_ref  : (B, T, D)   output
    hs_refs: B VMEM scratch buffers of shape (T, H) holding stacked hidden states
    """
    H = hidden_dim
    wh = wh_ref[...]          # (H, 3H) — loaded once
    bh = bh_ref[...]          # (1, 3H)

    def step(t, h):
        gi = gi_ref[t]                                             # (B, 3H)
        gh = jnp.dot(h, wh, preferred_element_type=jnp.float32) + bh
        r = jax.nn.sigmoid(gi[:, 0 * H:1 * H] + gh[:, 0 * H:1 * H])
        z = jax.nn.sigmoid(gi[:, 1 * H:2 * H] + gh[:, 1 * H:2 * H])
        n = jnp.tanh(gi[:, 2 * H:3 * H] + r * gh[:, 2 * H:3 * H])
        h_new = (1.0 - z) * n + z * h
        for b in range(batch):                      # B is static & tiny
            hs_refs[b][pl.ds(t, 1), :] = h_new[b:b + 1, :]
        return h_new

    h0 = jnp.zeros((batch, H), jnp.float32)
    _ = lax.fori_loop(0, seq_len, step, h0, unroll=True)   # short fixed trip count

    # Reconstruction head, hoisted out of the recurrence: batched over all T rows.
    w1 = w1_ref[...]; b1 = b1_ref[...]
    w2 = w2_ref[...]; b2 = b2_ref[...]
    w3 = w3_ref[...]; b3 = b3_ref[...]
    for b in range(batch):
        hb = hs_refs[b][...]                                        # (T, H)
        y = _selu(jnp.dot(hb, w1, preferred_element_type=jnp.float32) + b1)
        y = _selu(jnp.dot(y, w2, preferred_element_type=jnp.float32) + b2)
        y = _selu(jnp.dot(y, w3, preferred_element_type=jnp.float32) + b3)
        o_ref[b] = y.astype(o_ref.dtype)                            # (T, D) slab


def gru_decoder_forward(latents, params):
    """latents: (B, T, L) float32.  Returns (B, T, D) float32."""
    B, T, L = latents.shape
    H = params["wh"].shape[0]          # (H, 3H)
    D = params["w1"].shape[1]          # (H, D)

    # Hoist the input projection out of the serial recurrence: one well-shaped
    # XLA matmul over all T*B rows (also lays gi out time-major for the kernel).
    gi_all = jnp.einsum("btl,lg->tbg", latents, params["wi"],
                        preferred_element_type=jnp.float32) + params["bi"]  # (T,B,3H)

    kernel = functools.partial(gru_decoder_kernel,
                               hidden_dim=H, seq_len=T, batch=B)
    out = pl.pallas_call(
        kernel,
        out_shape=jax.ShapeDtypeStruct((B, T, D), jnp.float32),
        scratch_shapes=[pltpu.VMEM((T, H), jnp.float32) for _ in range(B)],
    )(gi_all,
      params["wh"], params["bh"],
      params["w1"], params["b1"],
      params["w2"], params["b2"],
      params["w3"], params["b3"])
    return out


def make_params(key, input_dim, hidden_dim, latent_dim):
    """Deterministic synthetic weights matching nn.GRU / nn.Linear shapes."""
    ks = jax.random.split(key, 10)
    H, D, L = hidden_dim, input_dim, latent_dim
    s = 0.1
    # PyTorch GRU stores weight_ih_l0:(3H, L), weight_hh_l0:(3H, H); we keep the
    # transposed (right-multiply) layout. Gate order along 3H is (r, z, n).
    wi = jax.random.normal(ks[0], (L, 3 * H), jnp.float32) * s
    wh = jax.random.normal(ks[1], (H, 3 * H), jnp.float32) * s
    bi = jax.random.normal(ks[2], (1, 3 * H), jnp.float32) * s   # bias_ih_l0
    bh = jax.random.normal(ks[3], (1, 3 * H), jnp.float32) * s   # bias_hh_l0
    w1 = jax.random.normal(ks[4], (H, D), jnp.float32) * s
    b1 = jax.random.normal(ks[5], (1, D), jnp.float32) * s
    w2 = jax.random.normal(ks[6], (D, D), jnp.float32) * s
    b2 = jax.random.normal(ks[7], (1, D), jnp.float32) * s
    w3 = jax.random.normal(ks[8], (D, D), jnp.float32) * s
    b3 = jax.random.normal(ks[9], (1, D), jnp.float32) * s
    return dict(wi=wi, wh=wh, bi=bi, bh=bh,
                w1=w1, b1=b1, w2=w2, b2=b2, w3=w3, b3=b3)


def reference_forward(latents, p):
    """Pure-JAX reference (lax.scan GRU) matching PyTorch semantics."""
    B, T, L = latents.shape
    H = p["wh"].shape[0]

    def step(h, x_t):
        gi = x_t @ p["wi"] + p["bi"]
        gh = h @ p["wh"] + p["bh"]
        r = jax.nn.sigmoid(gi[:, :H] + gh[:, :H])
        z = jax.nn.sigmoid(gi[:, H:2 * H] + gh[:, H:2 * H])
        n = jnp.tanh(gi[:, 2 * H:] + r * gh[:, 2 * H:])
        h_new = (1.0 - z) * n + z * h
        return h_new, h_new

    h0 = jnp.zeros((B, H), jnp.float32)
    _, hs = lax.scan(step, h0, jnp.transpose(latents, (1, 0, 2)))  # (T, B, H)
    y = jnp.transpose(hs, (1, 0, 2))                               # (B, T, H)
    selu = lambda v: SELU_SCALE * jnp.where(v > 0, v, SELU_ALPHA * (jnp.exp(v) - 1.0))
    y = selu(y @ p["w1"] + p["b1"])
    y = selu(y @ p["w2"] + p["b2"])
    y = selu(y @ p["w3"] + p["b3"])
    return y


if __name__ == "__main__":
    B, T = 2, 8
    latent_dim = 1
    hidden_dim = 64
    input_dim = 32   # stands in for mu.num_units (MUsim not available in-script)

    key = jax.random.PRNGKey(0)
    k_x, k_p = jax.random.split(key)
    latents = jax.random.normal(k_x, (B, T, latent_dim), jnp.float32)
    params = make_params(k_p, input_dim, hidden_dim, latent_dim)

    fwd = jax.jit(gru_decoder_forward)
    out = jax.block_until_ready(fwd(latents, params))

    ref = jax.block_until_ready(reference_forward(latents, params))
    np.testing.assert_allclose(np.asarray(out), np.asarray(ref), rtol=1e-5, atol=1e-5)

    print("KERNEL_OK")
</pallas_src>

<mosaic_0001>
module attributes {stable_mosaic.version = 11 : i64} {
  func.func @gru_decoder_kernel(%arg0: memref<8x2x192xf32, #tpu.memory_space<vmem>>, %arg1: memref<64x192xf32, #tpu.memory_space<vmem>>, %arg2: memref<1x192xf32, #tpu.memory_space<vmem>>, %arg3: memref<64x32xf32, #tpu.memory_space<vmem>>, %arg4: memref<1x32xf32, #tpu.memory_space<vmem>>, %arg5: memref<32x32xf32, #tpu.memory_space<vmem>>, %arg6: memref<1x32xf32, #tpu.memory_space<vmem>>, %arg7: memref<32x32xf32, #tpu.memory_space<vmem>>, %arg8: memref<1x32xf32, #tpu.memory_space<vmem>>, %arg9: memref<2x8x32xf32, #tpu.memory_space<vmem>>, %arg10: memref<8x64xf32, #tpu.memory_space<vmem>>, %arg11: memref<8x64xf32, #tpu.memory_space<vmem>>) attributes {dimension_semantics = [], scalar_prefetch = 0 : i64, scratch_operands = 2 : i64, tpu.core_type = #tpu.core_type<tc>} {
    %c0 = arith.constant 0 : index
    %c0_0 = arith.constant 0 : index
    %0 = vector.load %arg1[%c0, %c0_0] : memref<64x192xf32, #tpu.memory_space<vmem>>, vector<64x192xf32>
    %c0_1 = arith.constant 0 : index
    %c0_2 = arith.constant 0 : index
    %1 = vector.load %arg2[%c0_1, %c0_2] : memref<1x192xf32, #tpu.memory_space<vmem>>, vector<1x192xf32>
    %cst = arith.constant 0.000000e+00 : f32
    %2 = vector.broadcast %cst : f32 to vector<2x64xf32>
    %c0_i32 = arith.constant 0 : i32
    %3 = arith.index_cast %c0_i32 : i32 to index
    %c0_3 = arith.constant 0 : index
    %c0_4 = arith.constant 0 : index
    %4 = vector.load %arg0[%3, %c0_3, %c0_4] : memref<8x2x192xf32, #tpu.memory_space<vmem>>, vector<1x2x192xf32>
    %5 = vector.shape_cast %4 : vector<1x2x192xf32> to vector<2x192xf32>
    %cst_5 = arith.constant dense<0.000000e+00> : vector<2x192xf32>
    %6 = tpu.matmul %2, %0, %cst_5 {dimension_numbers = #tpu.dot_dimension_numbers<[1], [0], [0], [1], [0, 0, 1, 1], [], []>} : vector<2x64xf32>, vector<64x192xf32>, vector<2x192xf32> -> vector<2x192xf32>
    %7 = vector.broadcast %1 : vector<1x192xf32> to vector<2x192xf32>
    %8 = arith.addf %6, %7 : vector<2x192xf32>
    %9 = vector.extract_strided_slice %5 {offsets = [0, 0], sizes = [2, 64], strides = [1, 1]} : vector<2x192xf32> to vector<2x64xf32>
    %10 = vector.extract_strided_slice %8 {offsets = [0, 0], sizes = [2, 64], strides = [1, 1]} : vector<2x192xf32> to vector<2x64xf32>
    %11 = arith.addf %9, %10 : vector<2x64xf32>
    %12 = arith.negf %11 : vector<2x64xf32>
    %13 = math.exp %12 : vector<2x64xf32>
    %cst_6 = arith.constant 1.000000e+00 : f32
    %14 = vector.broadcast %cst_6 : f32 to vector<2x64xf32>
    %15 = arith.addf %14, %13 : vector<2x64xf32>
    %16 = arith.divf %14, %15 : vector<2x64xf32>
    %17 = vector.extract_strided_slice %5 {offsets = [0, 64], sizes = [2, 64], strides = [1, 1]} : vector<2x192xf32> to vector<2x64xf32>
    %18 = vector.extract_strided_slice %8 {offsets = [0, 64], sizes = [2, 64], strides = [1, 1]} : vector<2x192xf32> to vector<2x64xf32>
    %19 = arith.addf %17, %18 : vector<2x64xf32>
    %20 = arith.negf %19 : vector<2x64xf32>
    %21 = math.exp %20 : vector<2x64xf32>
    %cst_7 = arith.constant 1.000000e+00 : f32
    %22 = vector.broadcast %cst_7 : f32 to vector<2x64xf32>
    %23 = arith.addf %22, %21 : vector<2x64xf32>
    %24 = arith.divf %22, %23 : vector<2x64xf32>
    %25 = vector.extract_strided_slice %5 {offsets = [0, 128], sizes = [2, 64], strides = [1, 1]} : vector<2x192xf32> to vector<2x64xf32>
    %26 = vector.extract_strided_slice %8 {offsets = [0, 128], sizes = [2, 64], strides = [1, 1]} : vector<2x192xf32> to vector<2x64xf32>
    %27 = arith.mulf %16, %26 : vector<2x64xf32>
    %28 = arith.addf %25, %27 : vector<2x64xf32>
    %29 = math.tanh %28 : vector<2x64xf32>
    %cst_8 = arith.constant 1.000000e+00 : f32
    %30 = vector.broadcast %cst_8 : f32 to vector<2x64xf32>
    %31 = arith.subf %30, %24 : vector<2x64xf32>
    %32 = arith.mulf %31, %29 : vector<2x64xf32>
    %33 = arith.mulf %24, %2 : vector<2x64xf32>
    %34 = arith.addf %32, %33 : vector<2x64xf32>
    %35 = vector.extract_strided_slice %34 {offsets = [0, 0], sizes = [1, 64], strides = [1, 1]} : vector<2x64xf32> to vector<1x64xf32>
    %36 = arith.index_cast %c0_i32 : i32 to index
    %c0_9 = arith.constant 0 : index
    %37 = vector.load %arg10[%36, %c0_9] : memref<8x64xf32, #tpu.memory_space<vmem>>, vector<1x64xf32>
    tpu.vector_store %arg10[%36, %c0_9], %35 {strides = array<i32>} : memref<8x64xf32, #tpu.memory_space<vmem>>, vector<1x64xf32>,
    %38 = vector.extract_strided_slice %34 {offsets = [1, 0], sizes = [1, 64], strides = [1, 1]} : vector<2x64xf32> to vector<1x64xf32>
    %39 = arith.index_cast %c0_i32 : i32 to index
    %c0_10 = arith.constant 0 : index
    %40 = vector.load %arg11[%39, %c0_10] : memref<8x64xf32, #tpu.memory_space<vmem>>, vector<1x64xf32>
    tpu.vector_store %arg11[%39, %c0_10], %38 {strides = array<i32>} : memref<8x64xf32, #tpu.memory_space<vmem>>, vector<1x64xf32>,
    %c1_i32 = arith.constant 1 : i32
    %41 = arith.index_cast %c1_i32 : i32 to index
    %c0_11 = arith.constant 0 : index
    %c0_12 = arith.constant 0 : index
    %42 = vector.load %arg0[%41, %c0_11, %c0_12] : memref<8x2x192xf32, #tpu.memory_space<vmem>>, vector<1x2x192xf32>
    %43 = vector.shape_cast %42 : vector<1x2x192xf32> to vector<2x192xf32>
    %cst_13 = arith.constant dense<0.000000e+00> : vector<2x192xf32>
    %44 = tpu.matmul %34, %0, %cst_13 {dimension_numbers = #tpu.dot_dimension_numbers<[1], [0], [0], [1], [0, 0, 1, 1], [], []>} : vector<2x64xf32>, vector<64x192xf32>, vector<2x192xf32> -> vector<2x192xf32>
    %45 = vector.broadcast %1 : vector<1x192xf32> to vector<2x192xf32>
    %46 = arith.addf %44, %45 : vector<2x192xf32>
    %47 = vector.extract_strided_slice %43 {offsets = [0, 0], sizes = [2, 64], strides = [1, 1]} : vector<2x192xf32> to vector<2x64xf32>
    %48 = vector.extract_strided_slice %46 {offsets = [0, 0], sizes = [2, 64], strides = [1, 1]} : vector<2x192xf32> to vector<2x64xf32>
    %49 = arith.addf %47, %48 : vector<2x64xf32>
    %50 = arith.negf %49 : vector<2x64xf32>
    %51 = math.exp %50 : vector<2x64xf32>
    %cst_14 = arith.constant 1.000000e+00 : f32
    %52 = vector.broadcast %cst_14 : f32 to vector<2x64xf32>
    %53 = arith.addf %52, %51 : vector<2x64xf32>
    %54 = arith.divf %52, %53 : vector<2x64xf32>
    %55 = vector.extract_strided_slice %43 {offsets = [0, 64], sizes = [2, 64], strides = [1, 1]} : vector<2x192xf32> to vector<2x64xf32>
    %56 = vector.extract_strided_slice %46 {offsets = [0, 64], sizes = [2, 64], strides = [1, 1]} : vector<2x192xf32> to vector<2x64xf32>
    %57 = arith.addf %55, %56 : vector<2x64xf32>
    %58 = arith.negf %57 : vector<2x64xf32>
    %59 = math.exp %58 : vector<2x64xf32>
    %cst_15 = arith.constant 1.000000e+00 : f32
    %60 = vector.broadcast %cst_15 : f32 to vector<2x64xf32>
    %61 = arith.addf %60, %59 : vector<2x64xf32>
    %62 = arith.divf %60, %61 : vector<2x64xf32>
    %63 = vector.extract_strided_slice %43 {offsets = [0, 128], sizes = [2, 64], strides = [1, 1]} : vector<2x192xf32> to vector<2x64xf32>
    %64 = vector.extract_strided_slice %46 {offsets = [0, 128], sizes = [2, 64], strides = [1, 1]} : vector<2x192xf32> to vector<2x64xf32>
    %65 = arith.mulf %54, %64 : vector<2x64xf32>
    %66 = arith.addf %63, %65 : vector<2x64xf32>
    %67 = math.tanh %66 : vector<2x64xf32>
    %cst_16 = arith.constant 1.000000e+00 : f32
    %68 = vector.broadcast %cst_16 : f32 to vector<2x64xf32>
    %69 = arith.subf %68, %62 : vector<2x64xf32>
    %70 = arith.mulf %69, %67 : vector<2x64xf32>
    %71 = arith.mulf %62, %34 : vector<2x64xf32>
    %72 = arith.addf %70, %71 : vector<2x64xf32>
    %73 = vector.extract_strided_slice %72 {offsets = [0, 0], sizes = [1, 64], strides = [1, 1]} : vector<2x64xf32> to vector<1x64xf32>
    %74 = arith.index_cast %c1_i32 : i32 to index
    %c0_17 = arith.constant 0 : index
    %75 = vector.load %arg10[%74, %c0_17] : memref<8x64xf32, #tpu.memory_space<vmem>>, vector<1x64xf32>
    tpu.vector_store %arg10[%74, %c0_17], %73 {strides = array<i32>} : memref<8x64xf32, #tpu.memory_space<vmem>>, vector<1x64xf32>,
    %76 = vector.extract_strided_slice %72 {offsets = [1, 0], sizes = [1, 64], strides = [1, 1]} : vector<2x64xf32> to vector<1x64xf32>
    %77 = arith.index_cast %c1_i32 : i32 to index
    %c0_18 = arith.constant 0 : index
    %78 = vector.load %arg11[%77, %c0_18] : memref<8x64xf32, #tpu.memory_space<vmem>>, vector<1x64xf32>
    tpu.vector_store %arg11[%77, %c0_18], %76 {strides = array<i32>} : memref<8x64xf32, #tpu.memory_space<vmem>>, vector<1x64xf32>,
    %c2_i32 = arith.constant 2 : i32
    %79 = arith.index_cast %c2_i32 : i32 to index
    %c0_19 = arith.constant 0 : index
    %c0_20 = arith.constant 0 : index
    %80 = vector.load %arg0[%79, %c0_19, %c0_20] : memref<8x2x192xf32, #tpu.memory_space<vmem>>, vector<1x2x192xf32>
    %81 = vector.shape_cast %80 : vector<1x2x192xf32> to vector<2x192xf32>
    %cst_21 = arith.constant dense<0.000000e+00> : vector<2x192xf32>
    %82 = tpu.matmul %72, %0, %cst_21 {dimension_numbers = #tpu.dot_dimension_numbers<[1], [0], [0], [1], [0, 0, 1, 1], [], []>} : vector<2x64xf32>, vector<64x192xf32>, vector<2x192xf32> -> vector<2x192xf32>
    %83 = vector.broadcast %1 : vector<1x192xf32> to vector<2x192xf32>
    %84 = arith.addf %82, %83 : vector<2x192xf32>
    %85 = vector.extract_strided_slice %81 {offsets = [0, 0], sizes = [2, 64], strides = [1, 1]} : vector<2x192xf32> to vector<2x64xf32>
    %86 = vector.extract_strided_slice %84 {offsets = [0, 0], sizes = [2, 64], strides = [1, 1]} : vector<2x192xf32> to vector<2x64xf32>
    %87 = arith.addf %85, %86 : vector<2x64xf32>
    %88 = arith.negf %87 : vector<2x64xf32>
    %89 = math.exp %88 : vector<2x64xf32>
    %cst_22 = arith.constant 1.000000e+00 : f32
    %90 = vector.broadcast %cst_22 : f32 to vector<2x64xf32>
    %91 = arith.addf %90, %89 : vector<2x64xf32>
    %92 = arith.divf %90, %91 : vector<2x64xf32>
    %93 = vector.extract_strided_slice %81 {offsets = [0, 64], sizes = [2, 64], strides = [1, 1]} : vector<2x192xf32> to vector<2x64xf32>
    %94 = vector.extract_strided_slice %84 {offsets = [0, 64], sizes = [2, 64], strides = [1, 1]} : vector<2x192xf32> to vector<2x64xf32>
    %95 = arith.addf %93, %94 : vector<2x64xf32>
    %96 = arith.negf %95 : vector<2x64xf32>
    %97 = math.exp %96 : vector<2x64xf32>
    %cst_23 = arith.constant 1.000000e+00 : f32
    %98 = vector.broadcast %cst_23 : f32 to vector<2x64xf32>
    %99 = arith.addf %98, %97 : vector<2x64xf32>
    %100 = arith.divf %98, %99 : vector<2x64xf32>
    %101 = vector.extract_strided_slice %81 {offsets = [0, 128], sizes = [2, 64], strides = [1, 1]} : vector<2x192xf32> to vector<2x64xf32>
    %102 = vector.extract_strided_slice %84 {offsets = [0, 128], sizes = [2, 64], strides = [1, 1]} : vector<2x192xf32> to vector<2x64xf32>
    %103 = arith.mulf %92, %102 : vector<2x64xf32>
    %104 = arith.addf %101, %103 : vector<2x64xf32>
    %105 = math.tanh %104 : vector<2x64xf32>
    %cst_24 = arith.constant 1.000000e+00 : f32
    %106 = vector.broadcast %cst_24 : f32 to vector<2x64xf32>
    %107 = arith.subf %106, %100 : vector<2x64xf32>
    %108 = arith.mulf %107, %105 : vector<2x64xf32>
    %109 = arith.mulf %100, %72 : vector<2x64xf32>
    %110 = arith.addf %108, %109 : vector<2x64xf32>
    %111 = vector.extract_strided_slice %110 {offsets = [0, 0], sizes = [1, 64], strides = [1, 1]} : vector<2x64xf32> to vector<1x64xf32>
    %112 = arith.index_cast %c2_i32 : i32 to index
    %c0_25 = arith.constant 0 : index
    %113 = vector.load %arg10[%112, %c0_25] : memref<8x64xf32, #tpu.memory_space<vmem>>, vector<1x64xf32>
    tpu.vector_store %arg10[%112, %c0_25], %111 {strides = array<i32>} : memref<8x64xf32, #tpu.memory_space<vmem>>, vector<1x64xf32>,
    %114 = vector.extract_strided_slice %110 {offsets = [1, 0], sizes = [1, 64], strides = [1, 1]} : vector<2x64xf32> to vector<1x64xf32>
    %115 = arith.index_cast %c2_i32 : i32 to index
    %c0_26 = arith.constant 0 : index
    %116 = vector.load %arg11[%115, %c0_26] : memref<8x64xf32, #tpu.memory_space<vmem>>, vector<1x64xf32>
    tpu.vector_store %arg11[%115, %c0_26], %114 {strides = array<i32>} : memref<8x64xf32, #tpu.memory_space<vmem>>, vector<1x64xf32>,
    %c3_i32 = arith.constant 3 : i32
    %117 = arith.index_cast %c3_i32 : i32 to index
    %c0_27 = arith.constant 0 : index
    %c0_28 = arith.constant 0 : index
    %118 = vector.load %arg0[%117, %c0_27, %c0_28] : memref<8x2x192xf32, #tpu.memory_space<vmem>>, vector<1x2x192xf32>
    %119 = vector.shape_cast %118 : vector<1x2x192xf32> to vector<2x192xf32>
    %cst_29 = arith.constant dense<0.000000e+00> : vector<2x192xf32>
    %120 = tpu.matmul %110, %0, %cst_29 {dimension_numbers = #tpu.dot_dimension_numbers<[1], [0], [0], [1], [0, 0, 1, 1], [], []>} : vector<2x64xf32>, vector<64x192xf32>, vector<2x192xf32> -> vector<2x192xf32>
    %121 = vector.broadcast %1 : vector<1x192xf32> to vector<2x192xf32>
    %122 = arith.addf %120, %121 : vector<2x192xf32>
    %123 = vector.extract_strided_slice %119 {offsets = [0, 0], sizes = [2, 64], strides = [1, 1]} : vector<2x192xf32> to vector<2x64xf32>
    %124 = vector.extract_strided_slice %122 {offsets = [0, 0], sizes = [2, 64], strides = [1, 1]} : vector<2x192xf32> to vector<2x64xf32>
    %125 = arith.addf %123, %124 : vector<2x64xf32>
    %126 = arith.negf %125 : vector<2x64xf32>
    %127 = math.exp %126 : vector<2x64xf32>
    %cst_30 = arith.constant 1.000000e+00 : f32
    %128 = vector.broadcast %cst_30 : f32 to vector<2x64xf32>
    %129 = arith.addf %128, %127 : vector<2x64xf32>
    %130 = arith.divf %128, %129 : vector<2x64xf32>
    %131 = vector.extract_strided_slice %119 {offsets = [0, 64], sizes = [2, 64], strides = [1, 1]} : vector<2x192xf32> to vector<2x64xf32>
    %132 = vector.extract_strided_slice %122 {offsets = [0, 64], sizes = [2, 64], strides = [1, 1]} : vector<2x192xf32> to vector<2x64xf32>
    %133 = arith.addf %131, %132 : vector<2x64xf32>
    %134 = arith.negf %133 : vector<2x64xf32>
    %135 = math.exp %134 : vector<2x64xf32>
    %cst_31 = arith.constant 1.000000e+00 : f32
    %136 = vector.broadcast %cst_31 : f32 to vector<2x64xf32>
    %137 = arith.addf %136, %135 : vector<2x64xf32>
    %138 = arith.divf %136, %137 : vector<2x64xf32>
    %139 = vector.extract_strided_slice %119 {offsets = [0, 128], sizes = [2, 64], strides = [1, 1]} : vector<2x192xf32> to vector<2x64xf32>
    %140 = vector.extract_strided_slice %122 {offsets = [0, 128], sizes = [2, 64], strides = [1, 1]} : vector<2x192xf32> to vector<2x64xf32>
    %141 = arith.mulf %130, %140 : vector<2x64xf32>
    %142 = arith.addf %139, %141 : vector<2x64xf32>
    %143 = math.tanh %142 : vector<2x64xf32>
    %cst_32 = arith.constant 1.000000e+00 : f32
    %144 = vector.broadcast %cst_32 : f32 to vector<2x64xf32>
    %145 = arith.subf %144, %138 : vector<2x64xf32>
    %146 = arith.mulf %145, %143 : vector<2x64xf32>
    %147 = arith.mulf %138, %110 : vector<2x64xf32>
    %148 = arith.addf %146, %147 : vector<2x64xf32>
    %149 = vector.extract_strided_slice %148 {offsets = [0, 0], sizes = [1, 64], strides = [1, 1]} : vector<2x64xf32> to vector<1x64xf32>
    %150 = arith.index_cast %c3_i32 : i32 to index
    %c0_33 = arith.constant 0 : index
    %151 = vector.load %arg10[%150, %c0_33] : memref<8x64xf32, #tpu.memory_space<vmem>>, vector<1x64xf32>
    tpu.vector_store %arg10[%150, %c0_33], %149 {strides = array<i32>} : memref<8x64xf32, #tpu.memory_space<vmem>>, vector<1x64xf32>,
    %152 = vector.extract_strided_slice %148 {offsets = [1, 0], sizes = [1, 64], strides = [1, 1]} : vector<2x64xf32> to vector<1x64xf32>
    %153 = arith.index_cast %c3_i32 : i32 to index
    %c0_34 = arith.constant 0 : index
    %154 = vector.load %arg11[%153, %c0_34] : memref<8x64xf32, #tpu.memory_space<vmem>>, vector<1x64xf32>
    tpu.vector_store %arg11[%153, %c0_34], %152 {strides = array<i32>} : memref<8x64xf32, #tpu.memory_space<vmem>>, vector<1x64xf32>,
    %c4_i32 = arith.constant 4 : i32
    %155 = arith.index_cast %c4_i32 : i32 to index
    %c0_35 = arith.constant 0 : index
    %c0_36 = arith.constant 0 : index
    %156 = vector.load %arg0[%155, %c0_35, %c0_36] : memref<8x2x192xf32, #tpu.memory_space<vmem>>, vector<1x2x192xf32>
    %157 = vector.shape_cast %156 : vector<1x2x192xf32> to vector<2x192xf32>
    %cst_37 = arith.constant dense<0.000000e+00> : vector<2x192xf32>
    %158 = tpu.matmul %148, %0, %cst_37 {dimension_numbers = #tpu.dot_dimension_numbers<[1], [0], [0], [1], [0, 0, 1, 1], [], []>} : vector<2x64xf32>, vector<64x192xf32>, vector<2x192xf32> -> vector<2x192xf32>
    %159 = vector.broadcast %1 : vector<1x192xf32> to vector<2x192xf32>
    %160 = arith.addf %158, %159 : vector<2x192xf32>
    %161 = vector.extract_strided_slice %157 {offsets = [0, 0], sizes = [2, 64], strides = [1, 1]} : vector<2x192xf32> to vector<2x64xf32>
    %162 = vector.extract_strided_slice %160 {offsets = [0, 0], sizes = [2, 64], strides = [1, 1]} : vector<2x192xf32> to vector<2x64xf32>
    %163 = arith.addf %161, %162 : vector<2x64xf32>
    %164 = arith.negf %163 : vector<2x64xf32>
    %165 = math.exp %164 : vector<2x64xf32>
    %cst_38 = arith.constant 1.000000e+00 : f32
    %166 = vector.broadcast %cst_38 : f32 to vector<2x64xf32>
    %167 = arith.addf %166, %165 : vector<2x64xf32>
    %168 = arith.divf %166, %167 : vector<2x64xf32>
    %169 = vector.extract_strided_slice %157 {offsets = [0, 64], sizes = [2, 64], strides = [1, 1]} : vector<2x192xf32> to vector<2x64xf32>
    %170 = vector.extract_strided_slice %160 {offsets = [0, 64], sizes = [2, 64], strides = [1, 1]} : vector<2x192xf32> to vector<2x64xf32>
    %171 = arith.addf %169, %170 : vector<2x64xf32>
    %172 = arith.negf %171 : vector<2x64xf32>
    %173 = math.exp %172 : vector<2x64xf32>
    %cst_39 = arith.constant 1.000000e+00 : f32
    %174 = vector.broadcast %cst_39 : f32 to vector<2x64xf32>
    %175 = arith.addf %174, %173 : vector<2x64xf32>
    %176 = arith.divf %174, %175 : vector<2x64xf32>
    %177 = vector.extract_strided_slice %157 {offsets = [0, 128], sizes = [2, 64], strides = [1, 1]} : vector<2x192xf32> to vector<2x64xf32>
    %178 = vector.extract_strided_slice %160 {offsets = [0, 128], sizes = [2, 64], strides = [1, 1]} : vector<2x192xf32> to vector<2x64xf32>
    %179 = arith.mulf %168, %178 : vector<2x64xf32>
    %180 = arith.addf %177, %179 : vector<2x64xf32>
    %181 = math.tanh %180 : vector<2x64xf32>
    %cst_40 = arith.constant 1.000000e+00 : f32
    %182 = vector.broadcast %cst_40 : f32 to vector<2x64xf32>
    %183 = arith.subf %182, %176 : vector<2x64xf32>
    %184 = arith.mulf %183, %181 : vector<2x64xf32>
    %185 = arith.mulf %176, %148 : vector<2x64xf32>
    %186 = arith.addf %184, %185 : vector<2x64xf32>
    %187 = vector.extract_strided_slice %186 {offsets = [0, 0], sizes = [1, 64], strides = [1, 1]} : vector<2x64xf32> to vector<1x64xf32>
    %188 = arith.index_cast %c4_i32 : i32 to index
    %c0_41 = arith.constant 0 : index
    %189 = vector.load %arg10[%188, %c0_41] : memref<8x64xf32, #tpu.memory_space<vmem>>, vector<1x64xf32>
    tpu.vector_store %arg10[%188, %c0_41], %187 {strides = array<i32>} : memref<8x64xf32, #tpu.memory_space<vmem>>, vector<1x64xf32>,
    %190 = vector.extract_strided_slice %186 {offsets = [1, 0], sizes = [1, 64], strides = [1, 1]} : vector<2x64xf32> to vector<1x64xf32>
    %191 = arith.index_cast %c4_i32 : i32 to index
    %c0_42 = arith.constant 0 : index
    %192 = vector.load %arg11[%191, %c0_42] : memref<8x64xf32, #tpu.memory_space<vmem>>, vector<1x64xf32>
    tpu.vector_store %arg11[%191, %c0_42], %190 {strides = array<i32>} : memref<8x64xf32, #tpu.memory_space<vmem>>, vector<1x64xf32>,
    %c5_i32 = arith.constant 5 : i32
    %193 = arith.index_cast %c5_i32 : i32 to index
    %c0_43 = arith.constant 0 : index
    %c0_44 = arith.constant 0 : index
    %194 = vector.load %arg0[%193, %c0_43, %c0_44] : memref<8x2x192xf32, #tpu.memory_space<vmem>>, vector<1x2x192xf32>
    %195 = vector.shape_cast %194 : vector<1x2x192xf32> to vector<2x192xf32>
    %cst_45 = arith.constant dense<0.000000e+00> : vector<2x192xf32>
    %196 = tpu.matmul %186, %0, %cst_45 {dimension_numbers = #tpu.dot_dimension_numbers<[1], [0], [0], [1], [0, 0, 1, 1], [], []>} : vector<2x64xf32>, vector<64x192xf32>, vector<2x192xf32> -> vector<2x192xf32>
    %197 = vector.broadcast %1 : vector<1x192xf32> to vector<2x192xf32>
    %198 = arith.addf %196, %197 : vector<2x192xf32>
    %199 = vector.extract_strided_slice %195 {offsets = [0, 0], sizes = [2, 64], strides = [1, 1]} : vector<2x192xf32> to vector<2x64xf32>
    %200 = vector.extract_strided_slice %198 {offsets = [0, 0], sizes = [2, 64], strides = [1, 1]} : vector<2x192xf32> to vector<2x64xf32>
    %201 = arith.addf %199, %200 : vector<2x64xf32>
    %202 = arith.negf %201 : vector<2x64xf32>
    %203 = math.exp %202 : vector<2x64xf32>
    %cst_46 = arith.constant 1.000000e+00 : f32
    %204 = vector.broadcast %cst_46 : f32 to vector<2x64xf32>
    %205 = arith.addf %204, %203 : vector<2x64xf32>
    %206 = arith.divf %204, %205 : vector<2x64xf32>
    %207 = vector.extract_strided_slice %195 {offsets = [0, 64], sizes = [2, 64], strides = [1, 1]} : vector<2x192xf32> to vector<2x64xf32>
    %208 = vector.extract_strided_slice %198 {offsets = [0, 64], sizes = [2, 64], strides = [1, 1]} : vector<2x192xf32> to vector<2x64xf32>
    %209 = arith.addf %207, %208 : vector<2x64xf32>
    %210 = arith.negf %209 : vector<2x64xf32>
    %211 = math.exp %210 : vector<2x64xf32>
    %cst_47 = arith.constant 1.000000e+00 : f32
    %212 = vector.broadcast %cst_47 : f32 to vector<2x64xf32>
    %213 = arith.addf %212, %211 : vector<2x64xf32>
    %214 = arith.divf %212, %213 : vector<2x64xf32>
    %215 = vector.extract_strided_slice %195 {offsets = [0, 128], sizes = [2, 64], strides = [1, 1]} : vector<2x192xf32> to vector<2x64xf32>
    %216 = vector.extract_strided_slice %198 {offsets = [0, 128], sizes = [2, 64], strides = [1, 1]} : vector<2x192xf32> to vector<2x64xf32>
    %217 = arith.mulf %206, %216 : vector<2x64xf32>
    %218 = arith.addf %215, %217 : vector<2x64xf32>
    %219 = math.tanh %218 : vector<2x64xf32>
    %cst_48 = arith.constant 1.000000e+00 : f32
    %220 = vector.broadcast %cst_48 : f32 to vector<2x64xf32>
    %221 = arith.subf %220, %214 : vector<2x64xf32>
    %222 = arith.mulf %221, %219 : vector<2x64xf32>
    %223 = arith.mulf %214, %186 : vector<2x64xf32>
    %224 = arith.addf %222, %223 : vector<2x64xf32>
    %225 = vector.extract_strided_slice %224 {offsets = [0, 0], sizes = [1, 64], strides = [1, 1]} : vector<2x64xf32> to vector<1x64xf32>
    %226 = arith.index_cast %c5_i32 : i32 to index
    %c0_49 = arith.constant 0 : index
    %227 = vector.load %arg10[%226, %c0_49] : memref<8x64xf32, #tpu.memory_space<vmem>>, vector<1x64xf32>
    tpu.vector_store %arg10[%226, %c0_49], %225 {strides = array<i32>} : memref<8x64xf32, #tpu.memory_space<vmem>>, vector<1x64xf32>,
    %228 = vector.extract_strided_slice %224 {offsets = [1, 0], sizes = [1, 64], strides = [1, 1]} : vector<2x64xf32> to vector<1x64xf32>
    %229 = arith.index_cast %c5_i32 : i32 to index
    %c0_50 = arith.constant 0 : index
    %230 = vector.load %arg11[%229, %c0_50] : memref<8x64xf32, #tpu.memory_space<vmem>>, vector<1x64xf32>
    tpu.vector_store %arg11[%229, %c0_50], %228 {strides = array<i32>} : memref<8x64xf32, #tpu.memory_space<vmem>>, vector<1x64xf32>,
    %c6_i32 = arith.constant 6 : i32
    %231 = arith.index_cast %c6_i32 : i32 to index
    %c0_51 = arith.constant 0 : index
    %c0_52 = arith.constant 0 : index
    %232 = vector.load %arg0[%231, %c0_51, %c0_52] : memref<8x2x192xf32, #tpu.memory_space<vmem>>, vector<1x2x192xf32>
    %233 = vector.shape_cast %232 : vector<1x2x192xf32> to vector<2x192xf32>
    %cst_53 = arith.constant dense<0.000000e+00> : vector<2x192xf32>
    %234 = tpu.matmul %224, %0, %cst_53 {dimension_numbers = #tpu.dot_dimension_numbers<[1], [0], [0], [1], [0, 0, 1, 1], [], []>} : vector<2x64xf32>, vector<64x192xf32>, vector<2x192xf32> -> vector<2x192xf32>
    %235 = vector.broadcast %1 : vector<1x192xf32> to vector<2x192xf32>
    %236 = arith.addf %234, %235 : vector<2x192xf32>
    %237 = vector.extract_strided_slice %233 {offsets = [0, 0], sizes = [2, 64], strides = [1, 1]} : vector<2x192xf32> to vector<2x64xf32>
    %238 = vector.extract_strided_slice %236 {offsets = [0, 0], sizes = [2, 64], strides = [1, 1]} : vector<2x192xf32> to vector<2x64xf32>
    %239 = arith.addf %237, %238 : vector<2x64xf32>
    %240 = arith.negf %239 : vector<2x64xf32>
    %241 = math.exp %240 : vector<2x64xf32>
    %cst_54 = arith.constant 1.000000e+00 : f32
    %242 = vector.broadcast %cst_54 : f32 to vector<2x64xf32>
    %243 = arith.addf %242, %241 : vector<2x64xf32>
    %244 = arith.divf %242, %243 : vector<2x64xf32>
    %245 = vector.extract_strided_slice %233 {offsets = [0, 64], sizes = [2, 64], strides = [1, 1]} : vector<2x192xf32> to vector<2x64xf32>
    %246 = vector.extract_strided_slice %236 {offsets = [0, 64], sizes = [2, 64], strides = [1, 1]} : vector<2x192xf32> to vector<2x64xf32>
    %247 = arith.addf %245, %246 : vector<2x64xf32>
    %248 = arith.negf %247 : vector<2x64xf32>
    %249 = math.exp %248 : vector<2x64xf32>
    %cst_55 = arith.constant 1.000000e+00 : f32
    %250 = vector.broadcast %cst_55 : f32 to vector<2x64xf32>
    %251 = arith.addf %250, %249 : vector<2x64xf32>
    %252 = arith.divf %250, %251 : vector<2x64xf32>
    %253 = vector.extract_strided_slice %233 {offsets = [0, 128], sizes = [2, 64], strides = [1, 1]} : vector<2x192xf32> to vector<2x64xf32>
    %254 = vector.extract_strided_slice %236 {offsets = [0, 128], sizes = [2, 64], strides = [1, 1]} : vector<2x192xf32> to vector<2x64xf32>
    %255 = arith.mulf %244, %254 : vector<2x64xf32>
    %256 = arith.addf %253, %255 : vector<2x64xf32>
    %257 = math.tanh %256 : vector<2x64xf32>
    %cst_56 = arith.constant 1.000000e+00 : f32
    %258 = vector.broadcast %cst_56 : f32 to vector<2x64xf32>
    %259 = arith.subf %258, %252 : vector<2x64xf32>
    %260 = arith.mulf %259, %257 : vector<2x64xf32>
    %261 = arith.mulf %252, %224 : vector<2x64xf32>
    %262 = arith.addf %260, %261 : vector<2x64xf32>
    %263 = vector.extract_strided_slice %262 {offsets = [0, 0], sizes = [1, 64], strides = [1, 1]} : vector<2x64xf32> to vector<1x64xf32>
    %264 = arith.index_cast %c6_i32 : i32 to index
    %c0_57 = arith.constant 0 : index
    %265 = vector.load %arg10[%264, %c0_57] : memref<8x64xf32, #tpu.memory_space<vmem>>, vector<1x64xf32>
    tpu.vector_store %arg10[%264, %c0_57], %263 {strides = array<i32>} : memref<8x64xf32, #tpu.memory_space<vmem>>, vector<1x64xf32>,
    %266 = vector.extract_strided_slice %262 {offsets = [1, 0], sizes = [1, 64], strides = [1, 1]} : vector<2x64xf32> to vector<1x64xf32>
    %267 = arith.index_cast %c6_i32 : i32 to index
    %c0_58 = arith.constant 0 : index
    %268 = vector.load %arg11[%267, %c0_58] : memref<8x64xf32, #tpu.memory_space<vmem>>, vector<1x64xf32>
    tpu.vector_store %arg11[%267, %c0_58], %266 {strides = array<i32>} : memref<8x64xf32, #tpu.memory_space<vmem>>, vector<1x64xf32>,
    %c7_i32 = arith.constant 7 : i32
    %269 = arith.index_cast %c7_i32 : i32 to index
    %c0_59 = arith.constant 0 : index
    %c0_60 = arith.constant 0 : index
    %270 = vector.load %arg0[%269, %c0_59, %c0_60] : memref<8x2x192xf32, #tpu.memory_space<vmem>>, vector<1x2x192xf32>
    %271 = vector.shape_cast %270 : vector<1x2x192xf32> to vector<2x192xf32>
    %cst_61 = arith.constant dense<0.000000e+00> : vector<2x192xf32>
    %272 = tpu.matmul %262, %0, %cst_61 {dimension_numbers = #tpu.dot_dimension_numbers<[1], [0], [0], [1], [0, 0, 1, 1], [], []>} : vector<2x64xf32>, vector<64x192xf32>, vector<2x192xf32> -> vector<2x192xf32>
    %273 = vector.broadcast %1 : vector<1x192xf32> to vector<2x192xf32>
    %274 = arith.addf %272, %273 : vector<2x192xf32>
    %275 = vector.extract_strided_slice %271 {offsets = [0, 0], sizes = [2, 64], strides = [1, 1]} : vector<2x192xf32> to vector<2x64xf32>
    %276 = vector.extract_strided_slice %274 {offsets = [0, 0], sizes = [2, 64], strides = [1, 1]} : vector<2x192xf32> to vector<2x64xf32>
    %277 = arith.addf %275, %276 : vector<2x64xf32>
    %278 = arith.negf %277 : vector<2x64xf32>
    %279 = math.exp %278 : vector<2x64xf32>
    %cst_62 = arith.constant 1.000000e+00 : f32
    %280 = vector.broadcast %cst_62 : f32 to vector<2x64xf32>
    %281 = arith.addf %280, %279 : vector<2x64xf32>
    %282 = arith.divf %280, %281 : vector<2x64xf32>
    %283 = vector.extract_strided_slice %271 {offsets = [0, 64], sizes = [2, 64], strides = [1, 1]} : vector<2x192xf32> to vector<2x64xf32>
    %284 = vector.extract_strided_slice %274 {offsets = [0, 64], sizes = [2, 64], strides = [1, 1]} : vector<2x192xf32> to vector<2x64xf32>
    %285 = arith.addf %283, %284 : vector<2x64xf32>
    %286 = arith.negf %285 : vector<2x64xf32>
    %287 = math.exp %286 : vector<2x64xf32>
    %cst_63 = arith.constant 1.000000e+00 : f32
    %288 = vector.broadcast %cst_63 : f32 to vector<2x64xf32>
    %289 = arith.addf %288, %287 : vector<2x64xf32>
    %290 = arith.divf %288, %289 : vector<2x64xf32>
    %291 = vector.extract_strided_slice %271 {offsets = [0, 128], sizes = [2, 64], strides = [1, 1]} : vector<2x192xf32> to vector<2x64xf32>
    %292 = vector.extract_strided_slice %274 {offsets = [0, 128], sizes = [2, 64], strides = [1, 1]} : vector<2x192xf32> to vector<2x64xf32>
    %293 = arith.mulf %282, %292 : vector<2x64xf32>
    %294 = arith.addf %291, %293 : vector<2x64xf32>
    %295 = math.tanh %294 : vector<2x64xf32>
    %cst_64 = arith.constant 1.000000e+00 : f32
    %296 = vector.broadcast %cst_64 : f32 to vector<2x64xf32>
    %297 = arith.subf %296, %290 : vector<2x64xf32>
    %298 = arith.mulf %297, %295 : vector<2x64xf32>
    %299 = arith.mulf %290, %262 : vector<2x64xf32>
    %300 = arith.addf %298, %299 : vector<2x64xf32>
    %301 = vector.extract_strided_slice %300 {offsets = [0, 0], sizes = [1, 64], strides = [1, 1]} : vector<2x64xf32> to vector<1x64xf32>
    %302 = arith.index_cast %c7_i32 : i32 to index
    %c0_65 = arith.constant 0 : index
    %303 = vector.load %arg10[%302, %c0_65] : memref<8x64xf32, #tpu.memory_space<vmem>>, vector<1x64xf32>
    tpu.vector_store %arg10[%302, %c0_65], %301 {strides = array<i32>} : memref<8x64xf32, #tpu.memory_space<vmem>>, vector<1x64xf32>,
    %304 = vector.extract_strided_slice %300 {offsets = [1, 0], sizes = [1, 64], strides = [1, 1]} : vector<2x64xf32> to vector<1x64xf32>
    %305 = arith.index_cast %c7_i32 : i32 to index
    %c0_66 = arith.constant 0 : index
    %306 = vector.load %arg11[%305, %c0_66] : memref<8x64xf32, #tpu.memory_space<vmem>>, vector<1x64xf32>
    tpu.vector_store %arg11[%305, %c0_66], %304 {strides = array<i32>} : memref<8x64xf32, #tpu.memory_space<vmem>>, vector<1x64xf32>,
    %c8_i32 = arith.constant 8 : i32
    %c0_67 = arith.constant 0 : index
    %c0_68 = arith.constant 0 : index
    %307 = vector.load %arg3[%c0_67, %c0_68] : memref<64x32xf32, #tpu.memory_space<vmem>>, vector<64x32xf32>
    %c0_69 = arith.constant 0 : index
    %c0_70 = arith.constant 0 : index
    %308 = vector.load %arg4[%c0_69, %c0_70] : memref<1x32xf32, #tpu.memory_space<vmem>>, vector<1x32xf32>
    %c0_71 = arith.constant 0 : index
    %c0_72 = arith.constant 0 : index
    %309 = vector.load %arg5[%c0_71, %c0_72] : memref<32x32xf32, #tpu.memory_space<vmem>>, vector<32x32xf32>
    %c0_73 = arith.constant 0 : index
    %c0_74 = arith.constant 0 : index
    %310 = vector.load %arg6[%c0_73, %c0_74] : memref<1x32xf32, #tpu.memory_space<vmem>>, vector<1x32xf32>
    %c0_75 = arith.constant 0 : index
    %c0_76 = arith.constant 0 : index
    %311 = vector.load %arg7[%c0_75, %c0_76] : memref<32x32xf32, #tpu.memory_space<vmem>>, vector<32x32xf32>
    %c0_77 = arith.constant 0 : index
    %c0_78 = arith.constant 0 : index
    %312 = vector.load %arg8[%c0_77, %c0_78] : memref<1x32xf32, #tpu.memory_space<vmem>>, vector<1x32xf32>
    %c0_79 = arith.constant 0 : index
    %c0_80 = arith.constant 0 : index
    %313 = vector.load %arg10[%c0_79, %c0_80] : memref<8x64xf32, #tpu.memory_space<vmem>>, vector<8x64xf32>
    %cst_81 = arith.constant dense<0.000000e+00> : vector<8x32xf32>
    %314 = tpu.matmul %313, %307, %cst_81 {dimension_numbers = #tpu.dot_dimension_numbers<[1], [0], [0], [1], [0, 0, 1, 1], [], []>} : vector<8x64xf32>, vector<64x32xf32>, vector<8x32xf32> -> vector<8x32xf32>
    %315 = vector.broadcast %308 : vector<1x32xf32> to vector<8x32xf32>
    %316 = arith.addf %314, %315 : vector<8x32xf32>
    %cst_82 = arith.constant 0.000000e+00 : f32
    %317 = vector.broadcast %cst_82 : f32 to vector<8x32xf32>
    %318 = arith.cmpf ogt, %316, %317 : vector<8x32xf32>
    %cst_83 = arith.constant 0.000000e+00 : f32
    %319 = vector.broadcast %cst_83 : f32 to vector<8x32xf32>
    %320 = arith.minimumf %316, %319 : vector<8x32xf32>
    %321 = math.exp %320 : vector<8x32xf32>
    %cst_84 = arith.constant 1.000000e+00 : f32
    %322 = vector.broadcast %cst_84 : f32 to vector<8x32xf32>
    %323 = arith.subf %321, %322 : vector<8x32xf32>
    %cst_85 = arith.constant 1.67326319 : f32
    %324 = vector.broadcast %cst_85 : f32 to vector<8x32xf32>
    %325 = arith.mulf %324, %323 : vector<8x32xf32>
    %326 = arith.select %318, %316, %325 : vector<8x32xi1>, vector<8x32xf32>
    %cst_86 = arith.constant 1.05070102 : f32
    %327 = vector.broadcast %cst_86 : f32 to vector<8x32xf32>
    %328 = arith.mulf %327, %326 : vector<8x32xf32>
    %cst_87 = arith.constant dense<0.000000e+00> : vector<8x32xf32>
    %329 = tpu.matmul %328, %309, %cst_87 {dimension_numbers = #tpu.dot_dimension_numbers<[1], [0], [0], [1], [0, 0, 1, 1], [], []>} : vector<8x32xf32>, vector<32x32xf32>, vector<8x32xf32> -> vector<8x32xf32>
    %330 = vector.broadcast %310 : vector<1x32xf32> to vector<8x32xf32>
    %331 = arith.addf %329, %330 : vector<8x32xf32>
    %cst_88 = arith.constant 0.000000e+00 : f32
    %332 = vector.broadcast %cst_88 : f32 to vector<8x32xf32>
    %333 = arith.cmpf ogt, %331, %332 : vector<8x32xf32>
    %cst_89 = arith.constant 0.000000e+00 : f32
    %334 = vector.broadcast %cst_89 : f32 to vector<8x32xf32>
    %335 = arith.minimumf %331, %334 : vector<8x32xf32>
    %336 = math.exp %335 : vector<8x32xf32>
    %cst_90 = arith.constant 1.000000e+00 : f32
    %337 = vector.broadcast %cst_90 : f32 to vector<8x32xf32>
    %338 = arith.subf %336, %337 : vector<8x32xf32>
    %cst_91 = arith.constant 1.67326319 : f32
    %339 = vector.broadcast %cst_91 : f32 to vector<8x32xf32>
    %340 = arith.mulf %339, %338 : vector<8x32xf32>
    %341 = arith.select %333, %331, %340 : vector<8x32xi1>, vector<8x32xf32>
    %cst_92 = arith.constant 1.05070102 : f32
    %342 = vector.broadcast %cst_92 : f32 to vector<8x32xf32>
    %343 = arith.mulf %342, %341 : vector<8x32xf32>
    %cst_93 = arith.constant dense<0.000000e+00> : vector<8x32xf32>
    %344 = tpu.matmul %343, %311, %cst_93 {dimension_numbers = #tpu.dot_dimension_numbers<[1], [0], [0], [1], [0, 0, 1, 1], [], []>} : vector<8x32xf32>, vector<32x32xf32>, vector<8x32xf32> -> vector<8x32xf32>
    %345 = vector.broadcast %312 : vector<1x32xf32> to vector<8x32xf32>
    %346 = arith.addf %344, %345 : vector<8x32xf32>
    %cst_94 = arith.constant 0.000000e+00 : f32
    %347 = vector.broadcast %cst_94 : f32 to vector<8x32xf32>
    %348 = arith.cmpf ogt, %346, %347 : vector<8x32xf32>
    %cst_95 = arith.constant 0.000000e+00 : f32
    %349 = vector.broadcast %cst_95 : f32 to vector<8x32xf32>
    %350 = arith.minimumf %346, %349 : vector<8x32xf32>
    %351 = math.exp %350 : vector<8x32xf32>
    %cst_96 = arith.constant 1.000000e+00 : f32
    %352 = vector.broadcast %cst_96 : f32 to vector<8x32xf32>
    %353 = arith.subf %351, %352 : vector<8x32xf32>
    %cst_97 = arith.constant 1.67326319 : f32
    %354 = vector.broadcast %cst_97 : f32 to vector<8x32xf32>
    %355 = arith.mulf %354, %353 : vector<8x32xf32>
    %356 = arith.select %348, %346, %355 : vector<8x32xi1>, vector<8x32xf32>
    %cst_98 = arith.constant 1.05070102 : f32
    %357 = vector.broadcast %cst_98 : f32 to vector<8x32xf32>
    %358 = arith.mulf %357, %356 : vector<8x32xf32>
    %c0_99 = arith.constant 0 : index
    %c0_100 = arith.constant 0 : index
    %c0_101 = arith.constant 0 : index
    %359 = vector.load %arg9[%c0_99, %c0_100, %c0_101] : memref<2x8x32xf32, #tpu.memory_space<vmem>>, vector<1x8x32xf32>
    %360 = vector.shape_cast %359 : vector<1x8x32xf32> to vector<8x32xf32>
    %361 = vector.shape_cast %358 : vector<8x32xf32> to vector<1x8x32xf32>
    tpu.vector_store %arg9[%c0_99, %c0_100, %c0_101], %361 {strides = array<i32>} : memref<2x8x32xf32, #tpu.memory_space<vmem>>, vector<1x8x32xf32>,
    %c0_102 = arith.constant 0 : index
    %c0_103 = arith.constant 0 : index
    %362 = vector.load %arg11[%c0_102, %c0_103] : memref<8x64xf32, #tpu.memory_space<vmem>>, vector<8x64xf32>
    %cst_104 = arith.constant dense<0.000000e+00> : vector<8x32xf32>
    %363 = tpu.matmul %362, %307, %cst_104 {dimension_numbers = #tpu.dot_dimension_numbers<[1], [0], [0], [1], [0, 0, 1, 1], [], []>} : vector<8x64xf32>, vector<64x32xf32>, vector<8x32xf32> -> vector<8x32xf32>
    %364 = vector.broadcast %308 : vector<1x32xf32> to vector<8x32xf32>
    %365 = arith.addf %363, %364 : vector<8x32xf32>
    %cst_105 = arith.constant 0.000000e+00 : f32
    %366 = vector.broadcast %cst_105 : f32 to vector<8x32xf32>
    %367 = arith.cmpf ogt, %365, %366 : vector<8x32xf32>
    %cst_106 = arith.constant 0.000000e+00 : f32
    %368 = vector.broadcast %cst_106 : f32 to vector<8x32xf32>
    %369 = arith.minimumf %365, %368 : vector<8x32xf32>
    %370 = math.exp %369 : vector<8x32xf32>
    %cst_107 = arith.constant 1.000000e+00 : f32
    %371 = vector.broadcast %cst_107 : f32 to vector<8x32xf32>
    %372 = arith.subf %370, %371 : vector<8x32xf32>
    %cst_108 = arith.constant 1.67326319 : f32
    %373 = vector.broadcast %cst_108 : f32 to vector<8x32xf32>
    %374 = arith.mulf %373, %372 : vector<8x32xf32>
    %375 = arith.select %367, %365, %374 : vector<8x32xi1>, vector<8x32xf32>
    %cst_109 = arith.constant 1.05070102 : f32
    %376 = vector.broadcast %cst_109 : f32 to vector<8x32xf32>
    %377 = arith.mulf %376, %375 : vector<8x32xf32>
    %cst_110 = arith.constant dense<0.000000e+00> : vector<8x32xf32>
    %378 = tpu.matmul %377, %309, %cst_110 {dimension_numbers = #tpu.dot_dimension_numbers<[1], [0], [0], [1], [0, 0, 1, 1], [], []>} : vector<8x32xf32>, vector<32x32xf32>, vector<8x32xf32> -> vector<8x32xf32>
    %379 = vector.broadcast %310 : vector<1x32xf32> to vector<8x32xf32>
    %380 = arith.addf %378, %379 : vector<8x32xf32>
    %cst_111 = arith.constant 0.000000e+00 : f32
    %381 = vector.broadcast %cst_111 : f32 to vector<8x32xf32>
    %382 = arith.cmpf ogt, %380, %381 : vector<8x32xf32>
    %cst_112 = arith.constant 0.000000e+00 : f32
    %383 = vector.broadcast %cst_112 : f32 to vector<8x32xf32>
    %384 = arith.minimumf %380, %383 : vector<8x32xf32>
    %385 = math.exp %384 : vector<8x32xf32>
    %cst_113 = arith.constant 1.000000e+00 : f32
    %386 = vector.broadcast %cst_113 : f32 to vector<8x32xf32>
    %387 = arith.subf %385, %386 : vector<8x32xf32>
    %cst_114 = arith.constant 1.67326319 : f32
    %388 = vector.broadcast %cst_114 : f32 to vector<8x32xf32>
    %389 = arith.mulf %388, %387 : vector<8x32xf32>
    %390 = arith.select %382, %380, %389 : vector<8x32xi1>, vector<8x32xf32>
    %cst_115 = arith.constant 1.05070102 : f32
    %391 = vector.broadcast %cst_115 : f32 to vector<8x32xf32>
    %392 = arith.mulf %391, %390 : vector<8x32xf32>
    %cst_116 = arith.constant dense<0.000000e+00> : vector<8x32xf32>
    %393 = tpu.matmul %392, %311, %cst_116 {dimension_numbers = #tpu.dot_dimension_numbers<[1], [0], [0], [1], [0, 0, 1, 1], [], []>} : vector<8x32xf32>, vector<32x32xf32>, vector<8x32xf32> -> vector<8x32xf32>
    %394 = vector.broadcast %312 : vector<1x32xf32> to vector<8x32xf32>
    %395 = arith.addf %393, %394 : vector<8x32xf32>
    %cst_117 = arith.constant 0.000000e+00 : f32
    %396 = vector.broadcast %cst_117 : f32 to vector<8x32xf32>
    %397 = arith.cmpf ogt, %395, %396 : vector<8x32xf32>
    %cst_118 = arith.constant 0.000000e+00 : f32
    %398 = vector.broadcast %cst_118 : f32 to vector<8x32xf32>
    %399 = arith.minimumf %395, %398 : vector<8x32xf32>
    %400 = math.exp %399 : vector<8x32xf32>
    %cst_119 = arith.constant 1.000000e+00 : f32
    %401 = vector.broadcast %cst_119 : f32 to vector<8x32xf32>
    %402 = arith.subf %400, %401 : vector<8x32xf32>
    %cst_120 = arith.constant 1.67326319 : f32
    %403 = vector.broadcast %cst_120 : f32 to vector<8x32xf32>
    %404 = arith.mulf %403, %402 : vector<8x32xf32>
    %405 = arith.select %397, %395, %404 : vector<8x32xi1>, vector<8x32xf32>
    %cst_121 = arith.constant 1.05070102 : f32
    %406 = vector.broadcast %cst_121 : f32 to vector<8x32xf32>
    %407 = arith.mulf %406, %405 : vector<8x32xf32>
    %c1 = arith.constant 1 : index
    %c0_122 = arith.constant 0 : index
    %c0_123 = arith.constant 0 : index
    %408 = vector.load %arg9[%c1, %c0_122, %c0_123] : memref<2x8x32xf32, #tpu.memory_space<vmem>>, vector<1x8x32xf32>
    %409 = vector.shape_cast %408 : vector<1x8x32xf32> to vector<8x32xf32>
    %410 = vector.shape_cast %407 : vector<8x32xf32> to vector<1x8x32xf32>
    tpu.vector_store %arg9[%c1, %c0_122, %c0_123], %410 {strides = array<i32>} : memref<2x8x32xf32, #tpu.memory_space<vmem>>, vector<1x8x32xf32>,
    return
  }
}

</mosaic_0001>

<llo_original>
// kernel: gru_decoder_forward.1
$region0: #{gru_decoder_forward.1}
  #allocation0 [shape = 'u32[]', space=smem, size = 0x4, offset = 0x4, fixed_abs, tag = 'smem constant byte address 0x4 - core index']
  #allocation1 [shape = 'u32[144,128]{1,0:T(1,128)}', space=vmem, size = 0x12000, scoped, tag = 'internal scratch']
  #allocation2 [shape = 'f32[8,64]{1,0:T(8,128)}', space=vmem, size = 0x1000, scoped, tag = 'scratch operand']
  #allocation3 [shape = 'f32[8,64]{1,0:T(8,128)}', space=vmem, size = 0x1000, scoped, tag = 'scratch operand']
  %s0 = inlined_call_operand.vmem [shape: f32[8,2,192], index: 0, kind: input, shape index: {}]
  %s1 = inlined_call_operand.vmem [shape: f32[64,192], index: 1, kind: input, shape index: {}]
  %s2 = inlined_call_operand.vmem [shape: f32[1,192], index: 2, kind: input, shape index: {}]
  %s3 = inlined_call_operand.vmem [shape: f32[64,32], index: 3, kind: input, shape index: {}]
  %s4 = inlined_call_operand.vmem [shape: f32[1,32], index: 4, kind: input, shape index: {}]
  %s5 = inlined_call_operand.vmem [shape: f32[32,32], index: 5, kind: input, shape index: {}]
  %s6 = inlined_call_operand.vmem [shape: f32[1,32], index: 6, kind: input, shape index: {}]
  %s7 = inlined_call_operand.hbm [shape: f32[32,32], index: 7, kind: input, shape index: {}]
  %s8 = inlined_call_operand.vmem [shape: f32[1,32], index: 8, kind: input, shape index: {}]
  %s9 = inlined_call_operand.hbm [shape: f32[2,8,32], index: 9, kind: output, shape index: {}]
  %s10 = sld [smem:[#allocation0]]
  $region50: #{gru_decoder_forward.1} parent=0
    _
  %s12 = ssub.s32 1, %s10
  %s13 = scalar_select 0, %s12, %s10
  $region1: #{gru_decoder_forward.1} parent=0
    #allocation4 [shape = 'u8[16384]{0}', space=vmem, size = 0x4000, scoped, tag = 'input window, operand 7, single buffered']
    #allocation5 [shape = 's32[1]{0}', space=sflag, size = 0x4, scoped, tag = 'scoped memory for gru_decoder_forward.1']
    #allocation6 [shape = 's32[1]{0}', space=sflag, size = 0x4, scoped, tag = 'scoped memory for gru_decoder_forward.1']
    #allocation7 [shape = 'u8[8192]{0}', space=vmem, size = 0x2000, scoped, tag = 'output window, operand 0, single buffered']
    %14 = vsyncpa [#allocation5], 0
    %15 = vsyncpa [#allocation6], 0
    // Predicated region
    $region2: #{gru_decoder_forward.1} parent=1 // pred_check
      _
    $region3: #{gru_decoder_forward.1} parent=1 // pred_check_branch
      %17 = sbr.rel (0) target = $region5
    $region4: #{gru_decoder_forward.1} parent=1 // pred_region
      _
    $region5: #{gru_decoder_forward.1} parent=1 // pred_fallthru
      _
    // Predicated region
    $region6: #{gru_decoder_forward.1} parent=1 // pred_check
      _
    $region7: #{gru_decoder_forward.1} parent=1 // pred_check_branch
      %19 = sbr.rel (0) target = $region9
    $region8: #{gru_decoder_forward.1} parent=1 // pred_region
      _
    $region9: #{gru_decoder_forward.1} parent=1 // pred_fallthru
      _
    // Predicated region
    $region10: #{gru_decoder_forward.1} parent=1 // pred_check
      _
    $region11: #{gru_decoder_forward.1} parent=1 // pred_check_branch
      %21 = sbr.rel (0) target = $region13
    $region12: #{gru_decoder_forward.1} parent=1 // pred_region
      _
    $region13: #{gru_decoder_forward.1} parent=1 // pred_fallthru
      _
    // Predicated region
    $region14: #{gru_decoder_forward.1} parent=1 // pred_check
      _
    $region15: #{gru_decoder_forward.1} parent=1 // pred_check_branch
      %23 = sbr.rel (0) target = $region17
    $region16: #{gru_decoder_forward.1} parent=1 // pred_region
      _
    $region17: #{gru_decoder_forward.1} parent=1 // pred_fallthru
      _
    // Predicated region
    $region18: #{gru_decoder_forward.1} parent=1 // pred_check
      _
    $region19: #{gru_decoder_forward.1} parent=1 // pred_check_branch
      %25 = sbr.rel (0) target = $region21
    $region20: #{gru_decoder_forward.1} parent=1 // pred_region
      _
    $region21: #{gru_decoder_forward.1} parent=1 // pred_fallthru
      _
    // Predicated region
    $region22: #{gru_decoder_forward.1} parent=1 // pred_check
      _
    $region23: #{gru_decoder_forward.1} parent=1 // pred_check_branch
      %27 = sbr.rel (0) target = $region25
    $region24: #{gru_decoder_forward.1} parent=1 // pred_region
      _
    $region25: #{gru_decoder_forward.1} parent=1 // pred_fallthru
      _
    // Predicated region
    $region26: #{gru_decoder_forward.1} parent=1 // pred_check
      _
    $region27: #{gru_decoder_forward.1} parent=1 // pred_check_branch
      %29 = sbr.rel (0) target = $region29
    $region28: #{gru_decoder_forward.1} parent=1 // pred_region
      _
    $region29: #{gru_decoder_forward.1} parent=1 // pred_fallthru
      _
    // Predicated region
    $region30: #{gru_decoder_forward.1} parent=1 // pred_check
      _
    $region31: #{gru_decoder_forward.1} parent=1 // pred_check_branch
      %31 = sbr.rel (0) target = $region33
    $region32: #{gru_decoder_forward.1} parent=1 // pred_region
      %s33 = ssub.s32 512, 512
      %34 = vsyncadd [#allocation5], %s33
      %s35 = sshll.u32 [#allocation4], 4
      %s36 = int_to_ptr.vmem [resolvable:$true] %s35
      %41 = dma.hbm_to_vmem [thread:$0]  %s7, 512, %s36, [#allocation5], 128, 128, 8
    $region33: #{gru_decoder_forward.1} parent=1 // pred_fallthru
      _
    // Predicated region
    $region34: #{gru_decoder_forward.1} parent=1 // pred_check
      _
    $region35: #{gru_decoder_forward.1} parent=1 // pred_check_branch
      %43 = sbr.rel (0) target = $region37
    $region36: #{gru_decoder_forward.1} parent=1 // pred_region
      _
    $region37: #{gru_decoder_forward.1} parent=1 // pred_fallthru
      _
    // Predicated region
    $region38: #{gru_decoder_forward.1} parent=1 // pred_check
      _
    $region39: #{gru_decoder_forward.1} parent=1 // pred_check_branch
      %45 = sbr.rel (0) target = $region41
    $region40: #{gru_decoder_forward.1} parent=1 // pred_region
      %46 = dma.done [#allocation5], 512
    $region41: #{gru_decoder_forward.1} parent=1 // pred_fallthru
      _
    %v47 = vld [vmem:[%s1] sm:$0xff]
    %v48 = vld [vmem:[%s1 + $0x8] sm:$0xff]
    %v49 = vld [vmem:[%s1 + $0x10] sm:$0xff]
    %v50 = vld [vmem:[%s1 + $0x18] sm:$0xff]
    %v51 = vld [vmem:[%s1 + $0x20] sm:$0xff]
    %v52 = vld [vmem:[%s1 + $0x28] sm:$0xff]
    %v53 = vld [vmem:[%s1 + $0x30] sm:$0xff]
    %v54 = vld [vmem:[%s1 + $0x38] sm:$0xff]
    %v55 = vld [vmem:[%s1 + $0x40] sm:$0xff]
    %v56 = vld [vmem:[%s1 + $0x48] sm:$0xff]
    %v57 = vld [vmem:[%s1 + $0x50] sm:$0xff]
    %v58 = vld [vmem:[%s1 + $0x58] sm:$0xff]
    %v59 = vld [vmem:[%s1 + $0x60] sm:$0xff]
    %v60 = vld [vmem:[%s1 + $0x68] sm:$0xff]
    %v61 = vld [vmem:[%s1 + $0x70] sm:$0xff]
    %v62 = vld [vmem:[%s1 + $0x78] sm:$0xff]
    %v63 = vld [vmem:[%s2] sm:$0x3]
    %v64 = vld [vmem:[%s0] sm:$0xf]
    %v66 = vlaneseq
    %v67 = vshrl.u32 %v66, 7
    %v68 = vsub.s32 0, %v67
    %v69 = vrot.slane %v63, %v68
    %v70 = vlaneseq
    %v71 = vshrl.u32 %v70, 7
    %v72 = vsub.s32 1, %v71
    %v73 = vrot.slane %v63, %v72
    %vm76 = vcmask 523264
    %v78 = vsel %vm76, 0.0, 0
    %80 = vmatprep.subr.mxu0 0.0
    %81 = vmatpush1.msra.mxu0 0.0
    %82 = vmatprep.subr.mxu0 0.0
    %83 = vmatpush1.msra.mxu0 0.0
    %84 = vmatprep.subr.mxu0 0.0
    %85 = vmatpush1.msra.mxu0 0.0
    %86 = vmatprep.subr.mxu0 0.0
    %87 = vmatpush1.msra.mxu0 0.0
    %88 = vmatprep.subr.mxu0 0.0
    %89 = vmatpush1.msra.mxu0 0.0
    %90 = vmatprep.subr.mxu0 0.0
    %91 = vmatpush1.msra.mxu0 0.0
    %92 = vmatprep.subr.mxu0 0.0
    %93 = vmatpush1.msra.mxu0 0.0
    %94 = vmatprep.subr.mxu0 0.0
    %95 = vmatpush1.msra.mxu0 0.0
    %96 = vmatprep.subr.mxu0 %v62
    %97 = vmatpush1.msra.mxu0 %v61
    %98 = vmatprep.subr.mxu0 %v60
    %99 = vmatpush1.msra.mxu0 %v59
    %100 = vmatprep.subr.mxu0 %v58
    %101 = vmatpush1.msra.mxu0 %v57
    %102 = vmatprep.subr.mxu0 %v56
    %103 = vmatpush1.msra.mxu0 %v55
    %104 = vmatprep.subr.mxu0 %v54
    %105 = vmatpush1.msra.mxu0 %v53
    %106 = vmatprep.subr.mxu0 %v52
    %107 = vmatpush1.msra.mxu0 %v51
    %108 = vmatprep.subr.mxu0 %v50
    %109 = vmatpush1.msra.mxu0 %v49
    %110 = vmatprep.subr.mxu0 %v48
    %111 = vmatpush1.msra.mxu0 %v47
    %112 = vmatprep.subr.mxu0 0.0
    %113 = vmatpush2.msra.mxu0 0.0
    %114 = vmatprep.subr.mxu0 0.0
    %115 = vmatpush2.msra.mxu0 0.0
    %116 = vmatprep.subr.mxu0 0.0
    %117 = vmatpush2.msra.mxu0 0.0
    %118 = vmatprep.subr.mxu0 0.0
    %119 = vmatpush2.msra.mxu0 0.0
    %120 = vmatprep.subr.mxu0 0.0
    %121 = vmatpush2.msra.mxu0 0.0
    %122 = vmatprep.subr.mxu0 0.0
    %123 = vmatpush2.msra.mxu0 0.0
    %124 = vmatprep.subr.mxu0 0.0
    %125 = vmatpush2.msra.mxu0 0.0
    %126 = vmatprep.subr.mxu0 0.0
    %127 = vmatpush2.msra.mxu0 0.0
    %128 = vmatprep.subr.mxu0 0.0
    %129 = vmatpush2.msra.mxu0 0.0
    %130 = vmatprep.subr.mxu0 0.0
    %131 = vmatpush2.msra.mxu0 0.0
    %132 = vmatprep.subr.mxu0 0.0
    %133 = vmatpush2.msra.mxu0 0.0
    %134 = vmatprep.subr.mxu0 0.0
    %135 = vmatpush2.msra.mxu0 0.0
    %136 = vmatprep.subr.mxu0 0.0
    %137 = vmatpush2.msra.mxu0 0.0
    %138 = vmatprep.subr.mxu0 0.0
    %139 = vmatpush2.msra.mxu0 0.0
    %140 = vmatprep.subr.mxu0 0.0
    %141 = vmatpush2.msra.mxu0 0.0
    %142 = vmatprep.subr.mxu0 0.0
    %143 = vmatpush2.msra.mxu0 0.0
    %144 = vmatprep.mubr.f32.mxu0 0.0
    %145 = vmatmul.mubr.f32.gmra.mxu0 %v78
    %v146 = vpop.f32.mrf.mxu0
    %v147 = vadd.f32 %v69, %v146
    %v148 = vpop.f32.mrf.mxu0
    %v149 = vadd.f32 %v73, %v148
    %150 = vdwg.mxu0
    %v151 = vadd.f32 %v64, %v147
    %v152 = vxor.u32 %v151, 2147483648
    %v153 = vmul.f32 %v152, 1.442695
    %v154 = vpow.pop %v153
    %v155 = vadd.f32 %v154, 1.0
    %v156 = vrcp.pop %v155
    %v157 = vmul.f32 1.0, %v156
    %v158 = vmul.f32 %v157, %v149
    %v160 = vrot.slane %v64, 2
    %v162 = vadd.f32 %v160, %v158
    %v163 = vtanh.pop %v162
    %v164 = vsub.f32 1.0, %v157
    %166 = vrot.lane.b32.xlu0 %v163, 64
    %v167 = vpop.permute.xlu0 %166
    %v169 = vmul.f32 %v164, %v167
    %v170 = vmul.f32 %v157, 0.0
    %v171 = vadd.f32 %v169, %v170
    %v173 = vlaneseq
    %v174 = vshrl.u32 %v173, 7
    %v175 = vsub.s32 0, %v174
    %v176 = vrot.slane %v171, %v175
    %177 = vrot.lane.b32.xlu0 %v176, 64
    %v178 = vpop.permute.xlu0 %177
    %vm180 = vcmask 516096
    %181 = vst.msk [vmem:[#allocation2] sm:$0x1] %vm180, %v178
    %v182 = vlaneseq
    %v183 = vshrl.u32 %v182, 7
    %v184 = vsub.s32 1, %v183
    %v185 = vrot.slane %v171, %v184
    %186 = vrot.lane.b32.xlu0 %v185, 64
    %v187 = vpop.permute.xlu0 %186
    %vm189 = vcmask 517121
    %190 = vst.msk [vmem:[#allocation3 - $0x1] sm:$0x2] %vm189, %v187
    %s191 = scalar_lea.vmem %s0, 4
    %v192 = vld [vmem:[%s191] sm:$0xf]
    %v194 = vunpack.c.l.s4 1983009808
    %v195 = vunpack.c.0.s8 %v194
    %v196 = vlaneseq
    %v197 = vshrl.u32 %v196, 7
    %v198 = vsub.s32 %v195, %v197
    %v199 = vrot.slane %v171, %v198
    %200 = vrot.lane.b32.xlu0 %v199, 64
    %v201 = vpop.permute.xlu0 %200
    %v202 = vsel %vm76, %v201, 0
    %204 = vmatprep.subr.mxu0 0.0
    %205 = vmatpush1.msra.mxu0 0.0
    %206 = vmatprep.subr.mxu0 0.0
    %207 = vmatpush1.msra.mxu0 0.0
    %208 = vmatprep.subr.mxu0 0.0
    %209 = vmatpush1.msra.mxu0 0.0
    %210 = vmatprep.subr.mxu0 0.0
    %211 = vmatpush1.msra.mxu0 0.0
    %212 = vmatprep.subr.mxu0 0.0
    %213 = vmatpush1.msra.mxu0 0.0
    %214 = vmatprep.subr.mxu0 0.0
    %215 = vmatpush1.msra.mxu0 0.0
    %216 = vmatprep.subr.mxu0 0.0
    %217 = vmatpush1.msra.mxu0 0.0
    %218 = vmatprep.subr.mxu0 0.0
    %219 = vmatpush1.msra.mxu0 0.0
    %220 = vmatprep.subr.mxu0 %v62
    %221 = vmatpush1.msra.mxu0 %v61
    %222 = vmatprep.subr.mxu0 %v60
    %223 = vmatpush1.msra.mxu0 %v59
    %224 = vmatprep.subr.mxu0 %v58
    %225 = vmatpush1.msra.mxu0 %v57
    %226 = vmatprep.subr.mxu0 %v56
    %227 = vmatpush1.msra.mxu0 %v55
    %228 = vmatprep.subr.mxu0 %v54
    %229 = vmatpush1.msra.mxu0 %v53
    %230 = vmatprep.subr.mxu0 %v52
    %231 = vmatpush1.msra.mxu0 %v51
    %232 = vmatprep.subr.mxu0 %v50
    %233 = vmatpush1.msra.mxu0 %v49
    %234 = vmatprep.subr.mxu0 %v48
    %235 = vmatpush1.msra.mxu0 %v47
    %236 = vmatprep.subr.mxu0 0.0
    %237 = vmatpush2.msra.mxu0 0.0
    %238 = vmatprep.subr.mxu0 0.0
    %239 = vmatpush2.msra.mxu0 0.0
    %240 = vmatprep.subr.mxu0 0.0
    %241 = vmatpush2.msra.mxu0 0.0
    %242 = vmatprep.subr.mxu0 0.0
    %243 = vmatpush2.msra.mxu0 0.0
    %244 = vmatprep.subr.mxu0 0.0
    %245 = vmatpush2.msra.mxu0 0.0
    %246 = vmatprep.subr.mxu0 0.0
    %247 = vmatpush2.msra.mxu0 0.0
    %248 = vmatprep.subr.mxu0 0.0
    %249 = vmatpush2.msra.mxu0 0.0
    %250 = vmatprep.subr.mxu0 0.0
    %251 = vmatpush2.msra.mxu0 0.0
    %252 = vmatprep.subr.mxu0 0.0
    %253 = vmatpush2.msra.mxu0 0.0
    %254 = vmatprep.subr.mxu0 0.0
    %255 = vmatpush2.msra.mxu0 0.0
    %256 = vmatprep.subr.mxu0 0.0
    %257 = vmatpush2.msra.mxu0 0.0
    %258 = vmatprep.subr.mxu0 0.0
    %259 = vmatpush2.msra.mxu0 0.0
    %260 = vmatprep.subr.mxu0 0.0
    %261 = vmatpush2.msra.mxu0 0.0
    %262 = vmatprep.subr.mxu0 0.0
    %263 = vmatpush2.msra.mxu0 0.0
    %264 = vmatprep.subr.mxu0 0.0
    %265 = vmatpush2.msra.mxu0 0.0
    %266 = vmatprep.subr.mxu0 0.0
    %267 = vmatpush2.msra.mxu0 0.0
    %268 = vmatprep.mubr.f32.mxu0 0.0
    %269 = vmatmul.mubr.f32.gmra.mxu0 %v202
    %v270 = vpop.f32.mrf.mxu0
    %v271 = vadd.f32 %v69, %v270
    %v272 = vpop.f32.mrf.mxu0
    %v273 = vadd.f32 %v73, %v272
    %274 = vdwg.mxu0
    %v275 = vadd.f32 %v192, %v271
    %v276 = vxor.u32 %v275, 2147483648
    %v277 = vmul.f32 %v276, 1.442695
    %v278 = vpow.pop %v277
    %v279 = vadd.f32 %v278, 1.0
    %v280 = vrcp.pop %v279
    %v281 = vmul.f32 1.0, %v280
    %v282 = vmul.f32 %v281, %v273
    %v284 = vrot.slane %v192, 2
    %v286 = vadd.f32 %v284, %v282
    %v287 = vtanh.pop %v286
    %v288 = vsub.f32 1.0, %v281
    %290 = vrot.lane.b32.xlu0 %v287, 64
    %v291 = vpop.permute.xlu0 %290
    %v293 = vmul.f32 %v288, %v291
    %v294 = vmul.f32 %v281, %v171
    %v295 = vadd.f32 %v293, %v294
    %v297 = vlaneseq
    %v298 = vshrl.u32 %v297, 7
    %v299 = vsub.s32 0, %v298
    %v300 = vrot.slane %v295, %v299
    %301 = vrot.lane.b32.xlu0 %v300, 64
    %v302 = vpop.permute.xlu0 %301
    %304 = vst.msk [vmem:[#allocation2 + $0x1] sm:$0x1] %vm180, %v302
    %v305 = vlaneseq
    %v306 = vshrl.u32 %v305, 7
    %v307 = vsub.s32 1, %v306
    %v308 = vrot.slane %v295, %v307
    %309 = vrot.lane.b32.xlu0 %v308, 64
    %v310 = vpop.permute.xlu0 %309
    %312 = vst.msk [vmem:[#allocation3] sm:$0x2] %vm189, %v310
    %s313 = scalar_lea.vmem %s0, 8
    %v314 = vld [vmem:[%s313] sm:$0xf]
    %v316 = vunpack.c.l.s4 1983009808
    %v317 = vunpack.c.0.s8 %v316
    %v318 = vlaneseq
    %v319 = vshrl.u32 %v318, 7
    %v320 = vsub.s32 %v317, %v319
    %v321 = vrot.slane %v295, %v320
    %322 = vrot.lane.b32.xlu0 %v321, 64
    %v323 = vpop.permute.xlu0 %322
    %v324 = vsel %vm76, %v323, 0
    %326 = vmatprep.subr.mxu0 0.0
    %327 = vmatpush1.msra.mxu0 0.0
    %328 = vmatprep.subr.mxu0 0.0
    %329 = vmatpush1.msra.mxu0 0.0
    %330 = vmatprep.subr.mxu0 0.0
    %331 = vmatpush1.msra.mxu0 0.0
    %332 = vmatprep.subr.mxu0 0.0
    %333 = vmatpush1.msra.mxu0 0.0
    %334 = vmatprep.subr.mxu0 0.0
    %335 = vmatpush1.msra.mxu0 0.0
    %336 = vmatprep.subr.mxu0 0.0
    %337 = vmatpush1.msra.mxu0 0.0
    %338 = vmatprep.subr.mxu0 0.0
    %339 = vmatpush1.msra.mxu0 0.0
    %340 = vmatprep.subr.mxu0 0.0
    %341 = vmatpush1.msra.mxu0 0.0
    %342 = vmatprep.subr.mxu0 %v62
    %343 = vmatpush1.msra.mxu0 %v61
    %344 = vmatprep.subr.mxu0 %v60
    %345 = vmatpush1.msra.mxu0 %v59
    %346 = vmatprep.subr.mxu0 %v58
    %347 = vmatpush1.msra.mxu0 %v57
    %348 = vmatprep.subr.mxu0 %v56
    %349 = vmatpush1.msra.mxu0 %v55
    %350 = vmatprep.subr.mxu0 %v54
    %351 = vmatpush1.msra.mxu0 %v53
    %352 = vmatprep.subr.mxu0 %v52
    %353 = vmatpush1.msra.mxu0 %v51
    %354 = vmatprep.subr.mxu0 %v50
    %355 = vmatpush1.msra.mxu0 %v49
    %356 = vmatprep.subr.mxu0 %v48
    %357 = vmatpush1.msra.mxu0 %v47
    %358 = vmatprep.subr.mxu0 0.0
    %359 = vmatpush2.msra.mxu0 0.0
    %360 = vmatprep.subr.mxu0 0.0
    %361 = vmatpush2.msra.mxu0 0.0
    %362 = vmatprep.subr.mxu0 0.0
    %363 = vmatpush2.msra.mxu0 0.0
    %364 = vmatprep.subr.mxu0 0.0
    %365 = vmatpush2.msra.mxu0 0.0
    %366 = vmatprep.subr.mxu0 0.0
    %367 = vmatpush2.msra.mxu0 0.0
    %368 = vmatprep.subr.mxu0 0.0
    %369 = vmatpush2.msra.mxu0 0.0
    %370 = vmatprep.subr.mxu0 0.0
    %371 = vmatpush2.msra.mxu0 0.0
    %372 = vmatprep.subr.mxu0 0.0
    %373 = vmatpush2.msra.mxu0 0.0
    %374 = vmatprep.subr.mxu0 0.0
    %375 = vmatpush2.msra.mxu0 0.0
    %376 = vmatprep.subr.mxu0 0.0
    %377 = vmatpush2.msra.mxu0 0.0
    %378 = vmatprep.subr.mxu0 0.0
    %379 = vmatpush2.msra.mxu0 0.0
    %380 = vmatprep.subr.mxu0 0.0
    %381 = vmatpush2.msra.mxu0 0.0
    %382 = vmatprep.subr.mxu0 0.0
    %383 = vmatpush2.msra.mxu0 0.0
    %384 = vmatprep.subr.mxu0 0.0
    %385 = vmatpush2.msra.mxu0 0.0
    %386 = vmatprep.subr.mxu0 0.0
    %387 = vmatpush2.msra.mxu0 0.0
    %388 = vmatprep.subr.mxu0 0.0
    %389 = vmatpush2.msra.mxu0 0.0
    %390 = vmatprep.mubr.f32.mxu0 0.0
    %391 = vmatmul.mubr.f32.gmra.mxu0 %v324
    %v392 = vpop.f32.mrf.mxu0
    %v393 = vadd.f32 %v69, %v392
    %v394 = vpop.f32.mrf.mxu0
    %v395 = vadd.f32 %v73, %v394
    %396 = vdwg.mxu0
    %v397 = vadd.f32 %v314, %v393
    %v398 = vxor.u32 %v397, 2147483648
    %v399 = vmul.f32 %v398, 1.442695
    %v400 = vpow.pop %v399
    %v401 = vadd.f32 %v400, 1.0
    %v402 = vrcp.pop %v401
    %v403 = vmul.f32 1.0, %v402
    %v404 = vmul.f32 %v403, %v395
    %v406 = vrot.slane %v314, 2
    %v408 = vadd.f32 %v406, %v404
    %v409 = vtanh.pop %v408
    %v410 = vsub.f32 1.0, %v403
    %412 = vrot.lane.b32.xlu0 %v409, 64
    %v413 = vpop.permute.xlu0 %412
    %v415 = vmul.f32 %v410, %v413
    %v416 = vmul.f32 %v403, %v295
    %v417 = vadd.f32 %v415, %v416
    %v419 = vlaneseq
    %v420 = vshrl.u32 %v419, 7
    %v421 = vsub.s32 0, %v420
    %v422 = vrot.slane %v417, %v421
    %423 = vrot.lane.b32.xlu0 %v422, 64
    %v424 = vpop.permute.xlu0 %423
    %426 = vst.msk [vmem:[#allocation2 + $0x2] sm:$0x1] %vm180, %v424
    %v427 = vlaneseq
    %v428 = vshrl.u32 %v427, 7
    %v429 = vsub.s32 1, %v428
    %v430 = vrot.slane %v417, %v429
    %431 = vrot.lane.b32.xlu0 %v430, 64
    %v432 = vpop.permute.xlu0 %431
    %434 = vst.msk [vmem:[#allocation3 + $0x1] sm:$0x2] %vm189, %v432
    %s435 = scalar_lea.vmem %s0, 12
    %v436 = vld [vmem:[%s435] sm:$0xf]
    %v438 = vunpack.c.l.s4 1983009808
    %v439 = vunpack.c.0.s8 %v438
    %v440 = vlaneseq
    %v441 = vshrl.u32 %v440, 7
    %v442 = vsub.s32 %v439, %v441
    %v443 = vrot.slane %v417, %v442
    %444 = vrot.lane.b32.xlu0 %v443, 64
    %v445 = vpop.permute.xlu0 %444
    %v446 = vsel %vm76, %v445, 0
    %448 = vmatprep.subr.mxu0 0.0
    %449 = vmatpush1.msra.mxu0 0.0
    %450 = vmatprep.subr.mxu0 0.0
    %451 = vmatpush1.msra.mxu0 0.0
    %452 = vmatprep.subr.mxu0 0.0
    %453 = vmatpush1.msra.mxu0 0.0
    %454 = vmatprep.subr.mxu0 0.0
    %455 = vmatpush1.msra.mxu0 0.0
    %456 = vmatprep.subr.mxu0 0.0
    %457 = vmatpush1.msra.mxu0 0.0
    %458 = vmatprep.subr.mxu0 0.0
    %459 = vmatpush1.msra.mxu0 0.0
    %460 = vmatprep.subr.mxu0 0.0
    %461 = vmatpush1.msra.mxu0 0.0
    %462 = vmatprep.subr.mxu0 0.0
    %463 = vmatpush1.msra.mxu0 0.0
    %464 = vmatprep.subr.mxu0 %v62
    %465 = vmatpush1.msra.mxu0 %v61
    %466 = vmatprep.subr.mxu0 %v60
    %467 = vmatpush1.msra.mxu0 %v59
    %468 = vmatprep.subr.mxu0 %v58
    %469 = vmatpush1.msra.mxu0 %v57
    %470 = vmatprep.subr.mxu0 %v56
    %471 = vmatpush1.msra.mxu0 %v55
    %472 = vmatprep.subr.mxu0 %v54
    %473 = vmatpush1.msra.mxu0 %v53
    %474 = vmatprep.subr.mxu0 %v52
    %475 = vmatpush1.msra.mxu0 %v51
    %476 = vmatprep.subr.mxu0 %v50
    %477 = vmatpush1.msra.mxu0 %v49
    %478 = vmatprep.subr.mxu0 %v48
    %479 = vmatpush1.msra.mxu0 %v47
    %480 = vmatprep.subr.mxu0 0.0
    %481 = vmatpush2.msra.mxu0 0.0
    %482 = vmatprep.subr.mxu0 0.0
    %483 = vmatpush2.msra.mxu0 0.0
    %484 = vmatprep.subr.mxu0 0.0
    %485 = vmatpush2.msra.mxu0 0.0
    %486 = vmatprep.subr.mxu0 0.0
    %487 = vmatpush2.msra.mxu0 0.0
    %488 = vmatprep.subr.mxu0 0.0
    %489 = vmatpush2.msra.mxu0 0.0
    %490 = vmatprep.subr.mxu0 0.0
    %491 = vmatpush2.msra.mxu0 0.0
    %492 = vmatprep.subr.mxu0 0.0
    %493 = vmatpush2.msra.mxu0 0.0
    %494 = vmatprep.subr.mxu0 0.0
    %495 = vmatpush2.msra.mxu0 0.0
    %496 = vmatprep.subr.mxu0 0.0
    %497 = vmatpush2.msra.mxu0 0.0
    %498 = vmatprep.subr.mxu0 0.0
    %499 = vmatpush2.msra.mxu0 0.0
    %500 = vmatprep.subr.mxu0 0.0
    %501 = vmatpush2.msra.mxu0 0.0
    %502 = vmatprep.subr.mxu0 0.0
    %503 = vmatpush2.msra.mxu0 0.0
    %504 = vmatprep.subr.mxu0 0.0
    %505 = vmatpush2.msra.mxu0 0.0
    %506 = vmatprep.subr.mxu0 0.0
    %507 = vmatpush2.msra.mxu0 0.0
    %508 = vmatprep.subr.mxu0 0.0
    %509 = vmatpush2.msra.mxu0 0.0
    %510 = vmatprep.subr.mxu0 0.0
    %511 = vmatpush2.msra.mxu0 0.0
    %512 = vmatprep.mubr.f32.mxu0 0.0
    %513 = vmatmul.mubr.f32.gmra.mxu0 %v446
    %v514 = vpop.f32.mrf.mxu0
    %v515 = vadd.f32 %v69, %v514
    %v516 = vpop.f32.mrf.mxu0
    %v517 = vadd.f32 %v73, %v516
    %518 = vdwg.mxu0
    %v519 = vadd.f32 %v436, %v515
    %v520 = vxor.u32 %v519, 2147483648
    %v521 = vmul.f32 %v520, 1.442695
    %v522 = vpow.pop %v521
    %v523 = vadd.f32 %v522, 1.0
    %v524 = vrcp.pop %v523
    %v525 = vmul.f32 1.0, %v524
    %v526 = vmul.f32 %v525, %v517
    %v528 = vrot.slane %v436, 2
    %v530 = vadd.f32 %v528, %v526
    %v531 = vtanh.pop %v530
    %v532 = vsub.f32 1.0, %v525
    %534 = vrot.lane.b32.xlu0 %v531, 64
    %v535 = vpop.permute.xlu0 %534
    %v537 = vmul.f32 %v532, %v535
    %v538 = vmul.f32 %v525, %v417
    %v539 = vadd.f32 %v537, %v538
    %v541 = vlaneseq
    %v542 = vshrl.u32 %v541, 7
    %v543 = vsub.s32 0, %v542
    %v544 = vrot.slane %v539, %v543
    %545 = vrot.lane.b32.xlu0 %v544, 64
    %v546 = vpop.permute.xlu0 %545
    %548 = vst.msk [vmem:[#allocation2 + $0x3] sm:$0x1] %vm180, %v546
    %v549 = vlaneseq
    %v550 = vshrl.u32 %v549, 7
    %v551 = vsub.s32 1, %v550
    %v552 = vrot.slane %v539, %v551
    %553 = vrot.lane.b32.xlu0 %v552, 64
    %v554 = vpop.permute.xlu0 %553
    %556 = vst.msk [vmem:[#allocation3 + $0x2] sm:$0x2] %vm189, %v554
    %s557 = scalar_lea.vmem %s0, 16
    %v558 = vld [vmem:[%s557] sm:$0xf]
    %v560 = vunpack.c.l.s4 1983009808
    %v561 = vunpack.c.0.s8 %v560
    %v562 = vlaneseq
    %v563 = vshrl.u32 %v562, 7
    %v564 = vsub.s32 %v561, %v563
    %v565 = vrot.slane %v539, %v564
    %566 = vrot.lane.b32.xlu0 %v565, 64
    %v567 = vpop.permute.xlu0 %566
    %v568 = vsel %vm76, %v567, 0
    %570 = vmatprep.subr.mxu0 0.0
    %571 = vmatpush1.msra.mxu0 0.0
    %572 = vmatprep.subr.mxu0 0.0
    %573 = vmatpush1.msra.mxu0 0.0
    %574 = vmatprep.subr.mxu0 0.0
    %575 = vmatpush1.msra.mxu0 0.0
    %576 = vmatprep.subr.mxu0 0.0
    %577 = vmatpush1.msra.mxu0 0.0
    %578 = vmatprep.subr.mxu0 0.0
    %579 = vmatpush1.msra.mxu0 0.0
    %580 = vmatprep.subr.mxu0 0.0
    %581 = vmatpush1.msra.mxu0 0.0
    %582 = vmatprep.subr.mxu0 0.0
    %583 = vmatpush1.msra.mxu0 0.0
    %584 = vmatprep.subr.mxu0 0.0
    %585 = vmatpush1.msra.mxu0 0.0
    %586 = vmatprep.subr.mxu0 %v62
    %587 = vmatpush1.msra.mxu0 %v61
    %588 = vmatprep.subr.mxu0 %v60
    %589 = vmatpush1.msra.mxu0 %v59
    %590 = vmatprep.subr.mxu0 %v58
    %591 = vmatpush1.msra.mxu0 %v57
    %592 = vmatprep.subr.mxu0 %v56
    %593 = vmatpush1.msra.mxu0 %v55
    %594 = vmatprep.subr.mxu0 %v54
    %595 = vmatpush1.msra.mxu0 %v53
    %596 = vmatprep.subr.mxu0 %v52
    %597 = vmatpush1.msra.mxu0 %v51
    %598 = vmatprep.subr.mxu0 %v50
    %599 = vmatpush1.msra.mxu0 %v49
    %600 = vmatprep.subr.mxu0 %v48
    %601 = vmatpush1.msra.mxu0 %v47
    %602 = vmatprep.subr.mxu0 0.0
    %603 = vmatpush2.msra.mxu0 0.0
    %604 = vmatprep.subr.mxu0 0.0
    %605 = vmatpush2.msra.mxu0 0.0
    %606 = vmatprep.subr.mxu0 0.0
    %607 = vmatpush2.msra.mxu0 0.0
    %608 = vmatprep.subr.mxu0 0.0
    %609 = vmatpush2.msra.mxu0 0.0
    %610 = vmatprep.subr.mxu0 0.0
    %611 = vmatpush2.msra.mxu0 0.0
    %612 = vmatprep.subr.mxu0 0.0
    %613 = vmatpush2.msra.mxu0 0.0
    %614 = vmatprep.subr.mxu0 0.0
    %615 = vmatpush2.msra.mxu0 0.0
    %616 = vmatprep.subr.mxu0 0.0
    %617 = vmatpush2.msra.mxu0 0.0
    %618 = vmatprep.subr.mxu0 0.0
    %619 = vmatpush2.msra.mxu0 0.0
    %620 = vmatprep.subr.mxu0 0.0
    %621 = vmatpush2.msra.mxu0 0.0
    %622 = vmatprep.subr.mxu0 0.0
    %623 = vmatpush2.msra.mxu0 0.0
    %624 = vmatprep.subr.mxu0 0.0
    %625 = vmatpush2.msra.mxu0 0.0
    %626 = vmatprep.subr.mxu0 0.0
    %627 = vmatpush2.msra.mxu0 0.0
    %628 = vmatprep.subr.mxu0 0.0
    %629 = vmatpush2.msra.mxu0 0.0
    %630 = vmatprep.subr.mxu0 0.0
    %631 = vmatpush2.msra.mxu0 0.0
    %632 = vmatprep.subr.mxu0 0.0
    %633 = vmatpush2.msra.mxu0 0.0
    %634 = vmatprep.mubr.f32.mxu0 0.0
    %635 = vmatmul.mubr.f32.gmra.mxu0 %v568
    %v636 = vpop.f32.mrf.mxu0
    %v637 = vadd.f32 %v69, %v636
    %v638 = vpop.f32.mrf.mxu0
    %v639 = vadd.f32 %v73, %v638
    %640 = vdwg.mxu0
    %v641 = vadd.f32 %v558, %v637
    %v642 = vxor.u32 %v641, 2147483648
    %v643 = vmul.f32 %v642, 1.442695
    %v644 = vpow.pop %v643
    %v645 = vadd.f32 %v644, 1.0
    %v646 = vrcp.pop %v645
    %v647 = vmul.f32 1.0, %v646
    %v648 = vmul.f32 %v647, %v639
    %v650 = vrot.slane %v558, 2
    %v652 = vadd.f32 %v650, %v648
    %v653 = vtanh.pop %v652
    %v654 = vsub.f32 1.0, %v647
    %656 = vrot.lane.b32.xlu0 %v653, 64
    %v657 = vpop.permute.xlu0 %656
    %v659 = vmul.f32 %v654, %v657
    %v660 = vmul.f32 %v647, %v539
    %v661 = vadd.f32 %v659, %v660
    %v663 = vlaneseq
    %v664 = vshrl.u32 %v663, 7
    %v665 = vsub.s32 0, %v664
    %v666 = vrot.slane %v661, %v665
    %667 = vrot.lane.b32.xlu0 %v666, 64
    %v668 = vpop.permute.xlu0 %667
    %670 = vst.msk [vmem:[#allocation2 + $0x4] sm:$0x1] %vm180, %v668
    %v671 = vlaneseq
    %v672 = vshrl.u32 %v671, 7
    %v673 = vsub.s32 1, %v672
    %v674 = vrot.slane %v661, %v673
    %675 = vrot.lane.b32.xlu0 %v674, 64
    %v676 = vpop.permute.xlu0 %675
    %678 = vst.msk [vmem:[#allocation3 + $0x3] sm:$0x2] %vm189, %v676
    %s679 = scalar_lea.vmem %s0, 20
    %v680 = vld [vmem:[%s679] sm:$0xf]
    %v682 = vunpack.c.l.s4 1983009808
    %v683 = vunpack.c.0.s8 %v682
    %v684 = vlaneseq
    %v685 = vshrl.u32 %v684, 7
    %v686 = vsub.s32 %v683, %v685
    %v687 = vrot.slane %v661, %v686
    %688 = vrot.lane.b32.xlu0 %v687, 64
    %v689 = vpop.permute.xlu0 %688
    %v690 = vsel %vm76, %v689, 0
    %692 = vmatprep.subr.mxu0 0.0
    %693 = vmatpush1.msra.mxu0 0.0
    %694 = vmatprep.subr.mxu0 0.0
    %695 = vmatpush1.msra.mxu0 0.0
    %696 = vmatprep.subr.mxu0 0.0
    %697 = vmatpush1.msra.mxu0 0.0
    %698 = vmatprep.subr.mxu0 0.0
    %699 = vmatpush1.msra.mxu0 0.0
    %700 = vmatprep.subr.mxu0 0.0
    %701 = vmatpush1.msra.mxu0 0.0
    %702 = vmatprep.subr.mxu0 0.0
    %703 = vmatpush1.msra.mxu0 0.0
    %704 = vmatprep.subr.mxu0 0.0
    %705 = vmatpush1.msra.mxu0 0.0
    %706 = vmatprep.subr.mxu0 0.0
    %707 = vmatpush1.msra.mxu0 0.0
    %708 = vmatprep.subr.mxu0 %v62
    %709 = vmatpush1.msra.mxu0 %v61
    %710 = vmatprep.subr.mxu0 %v60
    %711 = vmatpush1.msra.mxu0 %v59
    %712 = vmatprep.subr.mxu0 %v58
    %713 = vmatpush1.msra.mxu0 %v57
    %714 = vmatprep.subr.mxu0 %v56
    %715 = vmatpush1.msra.mxu0 %v55
    %716 = vmatprep.subr.mxu0 %v54
    %717 = vmatpush1.msra.mxu0 %v53
    %718 = vmatprep.subr.mxu0 %v52
    %719 = vmatpush1.msra.mxu0 %v51
    %720 = vmatprep.subr.mxu0 %v50
    %721 = vmatpush1.msra.mxu0 %v49
    %722 = vmatprep.subr.mxu0 %v48
    %723 = vmatpush1.msra.mxu0 %v47
    %724 = vmatprep.subr.mxu0 0.0
    %725 = vmatpush2.msra.mxu0 0.0
    %726 = vmatprep.subr.mxu0 0.0
    %727 = vmatpush2.msra.mxu0 0.0
    %728 = vmatprep.subr.mxu0 0.0
    %729 = vmatpush2.msra.mxu0 0.0
    %730 = vmatprep.subr.mxu0 0.0
    %731 = vmatpush2.msra.mxu0 0.0
    %732 = vmatprep.subr.mxu0 0.0
    %733 = vmatpush2.msra.mxu0 0.0
    %734 = vmatprep.subr.mxu0 0.0
    %735 = vmatpush2.msra.mxu0 0.0
    %736 = vmatprep.subr.mxu0 0.0
    %737 = vmatpush2.msra.mxu0 0.0
    %738 = vmatprep.subr.mxu0 0.0
    %739 = vmatpush2.msra.mxu0 0.0
    %740 = vmatprep.subr.mxu0 0.0
    %741 = vmatpush2.msra.mxu0 0.0
    %742 = vmatprep.subr.mxu0 0.0
    %743 = vmatpush2.msra.mxu0 0.0
    %744 = vmatprep.subr.mxu0 0.0
    %745 = vmatpush2.msra.mxu0 0.0
    %746 = vmatprep.subr.mxu0 0.0
    %747 = vmatpush2.msra.mxu0 0.0
    %748 = vmatprep.subr.mxu0 0.0
    %749 = vmatpush2.msra.mxu0 0.0
    %750 = vmatprep.subr.mxu0 0.0
    %751 = vmatpush2.msra.mxu0 0.0
    %752 = vmatprep.subr.mxu0 0.0
    %753 = vmatpush2.msra.mxu0 0.0
    %754 = vmatprep.subr.mxu0 0.0
    %755 = vmatpush2.msra.mxu0 0.0
    %756 = vmatprep.mubr.f32.mxu0 0.0
    %757 = vmatmul.mubr.f32.gmra.mxu0 %v690
    %v758 = vpop.f32.mrf.mxu0
    %v759 = vadd.f32 %v69, %v758
    %v760 = vpop.f32.mrf.mxu0
    %v761 = vadd.f32 %v73, %v760
    %762 = vdwg.mxu0
    %v763 = vadd.f32 %v680, %v759
    %v764 = vxor.u32 %v763, 2147483648
    %v765 = vmul.f32 %v764, 1.442695
    %v766 = vpow.pop %v765
    %v767 = vadd.f32 %v766, 1.0
    %v768 = vrcp.pop %v767
    %v769 = vmul.f32 1.0, %v768
    %v770 = vmul.f32 %v769, %v761
    %v772 = vrot.slane %v680, 2
    %v774 = vadd.f32 %v772, %v770
    %v775 = vtanh.pop %v774
    %v776 = vsub.f32 1.0, %v769
    %778 = vrot.lane.b32.xlu0 %v775, 64
    %v779 = vpop.permute.xlu0 %778
    %v781 = vmul.f32 %v776, %v779
    %v782 = vmul.f32 %v769, %v661
    %v783 = vadd.f32 %v781, %v782
    %v785 = vlaneseq
    %v786 = vshrl.u32 %v785, 7
    %v787 = vsub.s32 0, %v786
    %v788 = vrot.slane %v783, %v787
    %789 = vrot.lane.b32.xlu0 %v788, 64
    %v790 = vpop.permute.xlu0 %789
    %792 = vst.msk [vmem:[#allocation2 + $0x5] sm:$0x1] %vm180, %v790
    %v793 = vlaneseq
    %v794 = vshrl.u32 %v793, 7
    %v795 = vsub.s32 1, %v794
    %v796 = vrot.slane %v783, %v795
    %797 = vrot.lane.b32.xlu0 %v796, 64
    %v798 = vpop.permute.xlu0 %797
    %800 = vst.msk [vmem:[#allocation3 + $0x4] sm:$0x2] %vm189, %v798
    %s801 = scalar_lea.vmem %s0, 24
    %v802 = vld [vmem:[%s801] sm:$0xf]
    %v804 = vunpack.c.l.s4 1983009808
    %v805 = vunpack.c.0.s8 %v804
    %v806 = vlaneseq
    %v807 = vshrl.u32 %v806, 7
    %v808 = vsub.s32 %v805, %v807
    %v809 = vrot.slane %v783, %v808
    %810 = vrot.lane.b32.xlu0 %v809, 64
    %v811 = vpop.permute.xlu0 %810
    %v812 = vsel %vm76, %v811, 0
    %814 = vmatprep.subr.mxu0 0.0
    %815 = vmatpush1.msra.mxu0 0.0
    %816 = vmatprep.subr.mxu0 0.0
    %817 = vmatpush1.msra.mxu0 0.0
    %818 = vmatprep.subr.mxu0 0.0
    %819 = vmatpush1.msra.mxu0 0.0
    %820 = vmatprep.subr.mxu0 0.0
    %821 = vmatpush1.msra.mxu0 0.0
    %822 = vmatprep.subr.mxu0 0.0
    %823 = vmatpush1.msra.mxu0 0.0
    %824 = vmatprep.subr.mxu0 0.0
    %825 = vmatpush1.msra.mxu0 0.0
    %826 = vmatprep.subr.mxu0 0.0
    %827 = vmatpush1.msra.mxu0 0.0
    %828 = vmatprep.subr.mxu0 0.0
    %829 = vmatpush1.msra.mxu0 0.0
    %830 = vmatprep.subr.mxu0 %v62
    %831 = vmatpush1.msra.mxu0 %v61
    %832 = vmatprep.subr.mxu0 %v60
    %833 = vmatpush1.msra.mxu0 %v59
    %834 = vmatprep.subr.mxu0 %v58
    %835 = vmatpush1.msra.mxu0 %v57
    %836 = vmatprep.subr.mxu0 %v56
    %837 = vmatpush1.msra.mxu0 %v55
    %838 = vmatprep.subr.mxu0 %v54
    %839 = vmatpush1.msra.mxu0 %v53
    %840 = vmatprep.subr.mxu0 %v52
    %841 = vmatpush1.msra.mxu0 %v51
    %842 = vmatprep.subr.mxu0 %v50
    %843 = vmatpush1.msra.mxu0 %v49
    %844 = vmatprep.subr.mxu0 %v48
    %845 = vmatpush1.msra.mxu0 %v47
    %846 = vmatprep.subr.mxu0 0.0
    %847 = vmatpush2.msra.mxu0 0.0
    %848 = vmatprep.subr.mxu0 0.0
    %849 = vmatpush2.msra.mxu0 0.0
    %850 = vmatprep.subr.mxu0 0.0
    %851 = vmatpush2.msra.mxu0 0.0
    %852 = vmatprep.subr.mxu0 0.0
    %853 = vmatpush2.msra.mxu0 0.0
    %854 = vmatprep.subr.mxu0 0.0
    %855 = vmatpush2.msra.mxu0 0.0
    %856 = vmatprep.subr.mxu0 0.0
    %857 = vmatpush2.msra.mxu0 0.0
    %858 = vmatprep.subr.mxu0 0.0
    %859 = vmatpush2.msra.mxu0 0.0
    %860 = vmatprep.subr.mxu0 0.0
    %861 = vmatpush2.msra.mxu0 0.0
    %862 = vmatprep.subr.mxu0 0.0
    %863 = vmatpush2.msra.mxu0 0.0
    %864 = vmatprep.subr.mxu0 0.0
    %865 = vmatpush2.msra.mxu0 0.0
    %866 = vmatprep.subr.mxu0 0.0
    %867 = vmatpush2.msra.mxu0 0.0
    %868 = vmatprep.subr.mxu0 0.0
    %869 = vmatpush2.msra.mxu0 0.0
    %870 = vmatprep.subr.mxu0 0.0
    %871 = vmatpush2.msra.mxu0 0.0
    %872 = vmatprep.subr.mxu0 0.0
    %873 = vmatpush2.msra.mxu0 0.0
    %874 = vmatprep.subr.mxu0 0.0
    %875 = vmatpush2.msra.mxu0 0.0
    %876 = vmatprep.subr.mxu0 0.0
    %877 = vmatpush2.msra.mxu0 0.0
    %878 = vmatprep.mubr.f32.mxu0 0.0
    %879 = vmatmul.mubr.f32.gmra.mxu0 %v812
    %v880 = vpop.f32.mrf.mxu0
    %v881 = vadd.f32 %v69, %v880
    %v882 = vpop.f32.mrf.mxu0
    %v883 = vadd.f32 %v73, %v882
    %884 = vdwg.mxu0
    %v885 = vadd.f32 %v802, %v881
    %v886 = vxor.u32 %v885, 2147483648
    %v887 = vmul.f32 %v886, 1.442695
    %v888 = vpow.pop %v887
    %v889 = vadd.f32 %v888, 1.0
    %v890 = vrcp.pop %v889
    %v891 = vmul.f32 1.0, %v890
    %v892 = vmul.f32 %v891, %v883
    %v894 = vrot.slane %v802, 2
    %v896 = vadd.f32 %v894, %v892
    %v897 = vtanh.pop %v896
    %v898 = vsub.f32 1.0, %v891
    %900 = vrot.lane.b32.xlu0 %v897, 64
    %v901 = vpop.permute.xlu0 %900
    %v903 = vmul.f32 %v898, %v901
    %v904 = vmul.f32 %v891, %v783
    %v905 = vadd.f32 %v903, %v904
    %v907 = vlaneseq
    %v908 = vshrl.u32 %v907, 7
    %v909 = vsub.s32 0, %v908
    %v910 = vrot.slane %v905, %v909
    %911 = vrot.lane.b32.xlu0 %v910, 64
    %v912 = vpop.permute.xlu0 %911
    %914 = vst.msk [vmem:[#allocation2 + $0x6] sm:$0x1] %vm180, %v912
    %v915 = vlaneseq
    %v916 = vshrl.u32 %v915, 7
    %v917 = vsub.s32 1, %v916
    %v918 = vrot.slane %v905, %v917
    %919 = vrot.lane.b32.xlu0 %v918, 64
    %v920 = vpop.permute.xlu0 %919
    %922 = vst.msk [vmem:[#allocation3 + $0x5] sm:$0x2] %vm189, %v920
    %s923 = scalar_lea.vmem %s0, 28
    %v924 = vld [vmem:[%s923] sm:$0xf]
    %v926 = vunpack.c.l.s4 1983009808
    %v927 = vunpack.c.0.s8 %v926
    %v928 = vlaneseq
    %v929 = vshrl.u32 %v928, 7
    %v930 = vsub.s32 %v927, %v929
    %v931 = vrot.slane %v905, %v930
    %932 = vrot.lane.b32.xlu0 %v931, 64
    %v933 = vpop.permute.xlu0 %932
    %v934 = vsel %vm76, %v933, 0
    %936 = vmatprep.subr.mxu0 0.0
    %937 = vmatpush1.msra.mxu0 0.0
    %938 = vmatprep.subr.mxu0 0.0
    %939 = vmatpush1.msra.mxu0 0.0
    %940 = vmatprep.subr.mxu0 0.0
    %941 = vmatpush1.msra.mxu0 0.0
    %942 = vmatprep.subr.mxu0 0.0
    %943 = vmatpush1.msra.mxu0 0.0
    %944 = vmatprep.subr.mxu0 0.0
    %945 = vmatpush1.msra.mxu0 0.0
    %946 = vmatprep.subr.mxu0 0.0
    %947 = vmatpush1.msra.mxu0 0.0
    %948 = vmatprep.subr.mxu0 0.0
    %949 = vmatpush1.msra.mxu0 0.0
    %950 = vmatprep.subr.mxu0 0.0
    %951 = vmatpush1.msra.mxu0 0.0
    %952 = vmatprep.subr.mxu0 %v62
    %953 = vmatpush1.msra.mxu0 %v61
    %954 = vmatprep.subr.mxu0 %v60
    %955 = vmatpush1.msra.mxu0 %v59
    %956 = vmatprep.subr.mxu0 %v58
    %957 = vmatpush1.msra.mxu0 %v57
    %958 = vmatprep.subr.mxu0 %v56
    %959 = vmatpush1.msra.mxu0 %v55
    %960 = vmatprep.subr.mxu0 %v54
    %961 = vmatpush1.msra.mxu0 %v53
    %962 = vmatprep.subr.mxu0 %v52
    %963 = vmatpush1.msra.mxu0 %v51
    %964 = vmatprep.subr.mxu0 %v50
    %965 = vmatpush1.msra.mxu0 %v49
    %966 = vmatprep.subr.mxu0 %v48
    %967 = vmatpush1.msra.mxu0 %v47
    %968 = vmatprep.subr.mxu0 0.0
    %969 = vmatpush2.msra.mxu0 0.0
    %970 = vmatprep.subr.mxu0 0.0
    %971 = vmatpush2.msra.mxu0 0.0
    %972 = vmatprep.subr.mxu0 0.0
    %973 = vmatpush2.msra.mxu0 0.0
    %974 = vmatprep.subr.mxu0 0.0
    %975 = vmatpush2.msra.mxu0 0.0
    %976 = vmatprep.subr.mxu0 0.0
    %977 = vmatpush2.msra.mxu0 0.0
    %978 = vmatprep.subr.mxu0 0.0
    %979 = vmatpush2.msra.mxu0 0.0
    %980 = vmatprep.subr.mxu0 0.0
    %981 = vmatpush2.msra.mxu0 0.0
    %982 = vmatprep.subr.mxu0 0.0
    %983 = vmatpush2.msra.mxu0 0.0
    %984 = vmatprep.subr.mxu0 0.0
    %985 = vmatpush2.msra.mxu0 0.0
    %986 = vmatprep.subr.mxu0 0.0
    %987 = vmatpush2.msra.mxu0 0.0
    %988 = vmatprep.subr.mxu0 0.0
    %989 = vmatpush2.msra.mxu0 0.0
    %990 = vmatprep.subr.mxu0 0.0
    %991 = vmatpush2.msra.mxu0 0.0
    %992 = vmatprep.subr.mxu0 0.0
    %993 = vmatpush2.msra.mxu0 0.0
    %994 = vmatprep.subr.mxu0 0.0
    %995 = vmatpush2.msra.mxu0 0.0
    %996 = vmatprep.subr.mxu0 0.0
    %997 = vmatpush2.msra.mxu0 0.0
    %998 = vmatprep.subr.mxu0 0.0
    %999 = vmatpush2.msra.mxu0 0.0
    %1000 = vmatprep.mubr.f32.mxu0 0.0
    %1001 = vmatmul.mubr.f32.gmra.mxu0 %v934
    %v1002 = vpop.f32.mrf.mxu0
    %v1003 = vadd.f32 %v69, %v1002
    %v1004 = vpop.f32.mrf.mxu0
    %v1005 = vadd.f32 %v73, %v1004
    %1006 = vdwg.mxu0
    %v1007 = vadd.f32 %v924, %v1003
    %v1008 = vxor.u32 %v1007, 2147483648
    %v1009 = vmul.f32 %v1008, 1.442695
    %v1010 = vpow.pop %v1009
    %v1011 = vadd.f32 %v1010, 1.0
    %v1012 = vrcp.pop %v1011
    %v1013 = vmul.f32 1.0, %v1012
    %v1014 = vmul.f32 %v1013, %v1005
    %v1016 = vrot.slane %v924, 2
    %v1018 = vadd.f32 %v1016, %v1014
    %v1019 = vtanh.pop %v1018
    %v1020 = vsub.f32 1.0, %v1013
    %1022 = vrot.lane.b32.xlu0 %v1019, 64
    %v1023 = vpop.permute.xlu0 %1022
    %v1025 = vmul.f32 %v1020, %v1023
    %v1026 = vmul.f32 %v1013, %v905
    %v1027 = vadd.f32 %v1025, %v1026
    %v1029 = vlaneseq
    %v1030 = vshrl.u32 %v1029, 7
    %v1031 = vsub.s32 0, %v1030
    %v1032 = vrot.slane %v1027, %v1031
    %1033 = vrot.lane.b32.xlu0 %v1032, 64
    %v1034 = vpop.permute.xlu0 %1033
    %1036 = vst.msk [vmem:[#allocation2 + $0x7] sm:$0x1] %vm180, %v1034
    %v1037 = vlaneseq
    %v1038 = vshrl.u32 %v1037, 7
    %v1039 = vsub.s32 1, %v1038
    %v1040 = vrot.slane %v1027, %v1039
    %1041 = vrot.lane.b32.xlu0 %v1040, 64
    %v1042 = vpop.permute.xlu0 %1041
    %1044 = vst.msk [vmem:[#allocation3 + $0x6] sm:$0x2] %vm189, %v1042
    %v1045 = vld [vmem:[%s3] sm:$0xff]
    %v1046 = vld [vmem:[%s3 + $0x8] sm:$0xff]
    %v1047 = vld [vmem:[%s3 + $0x10] sm:$0xff]
    %v1048 = vld [vmem:[%s3 + $0x18] sm:$0xff]
    %v1049 = vld [vmem:[%s3 + $0x20] sm:$0xff]
    %v1050 = vld [vmem:[%s3 + $0x28] sm:$0xff]
    %v1051 = vld [vmem:[%s3 + $0x30] sm:$0xff]
    %v1052 = vld [vmem:[%s3 + $0x38] sm:$0xff]
    %v1053 = vld [vmem:[%s4] sm:$0x1]
    %v1054 = vld [vmem:[%s5] sm:$0xff]
    %v1055 = vld [vmem:[%s5 + $0x8] sm:$0xff]
    %v1056 = vld [vmem:[%s5 + $0x10] sm:$0xff]
    %v1057 = vld [vmem:[%s5 + $0x18] sm:$0xff]
    %v1058 = vld [vmem:[%s6] sm:$0x1]
    %v1059 = vld [vmem:[#allocation4] sm:$0xff]
    %v1060 = vld [vmem:[#allocation4 + $0x8] sm:$0xff]
    %v1061 = vld [vmem:[#allocation4 + $0x10] sm:$0xff]
    %v1062 = vld [vmem:[#allocation4 + $0x18] sm:$0xff]
    %v1063 = vld [vmem:[%s8] sm:$0x1]
    %v1064 = vld [vmem:[#allocation2] sm:$0xff]
    %v1066 = vlaneseq
    %v1067 = vshrl.u32 %v1066, 7
    %v1068 = vsub.s32 0, %v1067
    %v1069 = vrot.slane %v1053, %v1068
    %v1072 = vsel %vm76, %v1064, 0
    %1074 = vmatprep.subr.mxu0 0.0
    %1075 = vmatpush1.msra.mxu0 0.0
    %1076 = vmatprep.subr.mxu0 0.0
    %1077 = vmatpush1.msra.mxu0 0.0
    %1078 = vmatprep.subr.mxu0 0.0
    %1079 = vmatpush1.msra.mxu0 0.0
    %1080 = vmatprep.subr.mxu0 0.0
    %1081 = vmatpush1.msra.mxu0 0.0
    %1082 = vmatprep.subr.mxu0 0.0
    %1083 = vmatpush1.msra.mxu0 0.0
    %1084 = vmatprep.subr.mxu0 0.0
    %1085 = vmatpush1.msra.mxu0 0.0
    %1086 = vmatprep.subr.mxu0 0.0
    %1087 = vmatpush1.msra.mxu0 0.0
    %1088 = vmatprep.subr.mxu0 0.0
    %1089 = vmatpush1.msra.mxu0 0.0
    %1090 = vmatprep.subr.mxu0 0.0
    %1091 = vmatpush1.msra.mxu0 %v1052
    %1092 = vmatprep.subr.mxu0 0.0
    %1093 = vmatpush1.msra.mxu0 %v1051
    %1094 = vmatprep.subr.mxu0 0.0
    %1095 = vmatpush1.msra.mxu0 %v1050
    %1096 = vmatprep.subr.mxu0 0.0
    %1097 = vmatpush1.msra.mxu0 %v1049
    %1098 = vmatprep.subr.mxu0 0.0
    %1099 = vmatpush1.msra.mxu0 %v1048
    %1100 = vmatprep.subr.mxu0 0.0
    %1101 = vmatpush1.msra.mxu0 %v1047
    %1102 = vmatprep.subr.mxu0 0.0
    %1103 = vmatpush1.msra.mxu0 %v1046
    %1104 = vmatprep.subr.mxu0 0.0
    %1105 = vmatpush1.msra.mxu0 %v1045
    %1106 = vmatprep.subr.mxu0 0.0
    %1107 = vmatpush2.msra.mxu0 0.0
    %1108 = vmatprep.subr.mxu0 0.0
    %1109 = vmatpush2.msra.mxu0 0.0
    %1110 = vmatprep.subr.mxu0 0.0
    %1111 = vmatpush2.msra.mxu0 0.0
    %1112 = vmatprep.subr.mxu0 0.0
    %1113 = vmatpush2.msra.mxu0 0.0
    %1114 = vmatprep.subr.mxu0 0.0
    %1115 = vmatpush2.msra.mxu0 0.0
    %1116 = vmatprep.subr.mxu0 0.0
    %1117 = vmatpush2.msra.mxu0 0.0
    %1118 = vmatprep.subr.mxu0 0.0
    %1119 = vmatpush2.msra.mxu0 0.0
    %1120 = vmatprep.subr.mxu0 0.0
    %1121 = vmatpush2.msra.mxu0 0.0
    %1122 = vmatprep.subr.mxu0 0.0
    %1123 = vmatpush2.msra.mxu0 0.0
    %1124 = vmatprep.subr.mxu0 0.0
    %1125 = vmatpush2.msra.mxu0 0.0
    %1126 = vmatprep.subr.mxu0 0.0
    %1127 = vmatpush2.msra.mxu0 0.0
    %1128 = vmatprep.subr.mxu0 0.0
    %1129 = vmatpush2.msra.mxu0 0.0
    %1130 = vmatprep.subr.mxu0 0.0
    %1131 = vmatpush2.msra.mxu0 0.0
    %1132 = vmatprep.subr.mxu0 0.0
    %1133 = vmatpush2.msra.mxu0 0.0
    %1134 = vmatprep.subr.mxu0 0.0
    %1135 = vmatpush2.msra.mxu0 0.0
    %1136 = vmatprep.subr.mxu0 0.0
    %1137 = vmatpush2.msra.mxu0 0.0
    %1138 = vmatprep.mubr.f32.mxu0 0.0
    %1139 = vmatmul.mubr.f32.gmra.mxu0 %v1072
    %v1140 = vpop.f32.mrf.mxu0
    %v1141 = vadd.f32 %v1069, %v1140
    %v1142 = vpop.f32.mrf.mxu0
    %1143 = vdwg.mxu0
    %vm1144 = vcmp.gt.f32.partialorder %v1141, 0.0
    %v1145 = vmin.f32 %v1141, 0.0
    %v1146 = vmul.f32 %v1145, 1.442695
    %v1147 = vpow.pop %v1146
    %v1148 = vsub.f32 %v1147, 1.0
    %v1149 = vmul.f32 %v1148, 1.6732632
    %v1150 = vsel %vm1144, %v1141, %v1149
    %v1151 = vmul.f32 %v1150, 1.050701
    %v1153 = vlaneseq
    %v1154 = vshrl.u32 %v1153, 7
    %v1155 = vsub.s32 0, %v1154
    %v1156 = vrot.slane %v1058, %v1155
    %vm1158 = vcmask 261120
    %v1160 = vsel %vm1158, %v1151, 0
    %1162 = vmatprep.subr.mxu0 0.0
    %1163 = vmatpush1.msra.mxu0 0.0
    %1164 = vmatprep.subr.mxu0 0.0
    %1165 = vmatpush1.msra.mxu0 0.0
    %1166 = vmatprep.subr.mxu0 0.0
    %1167 = vmatpush1.msra.mxu0 0.0
    %1168 = vmatprep.subr.mxu0 0.0
    %1169 = vmatpush1.msra.mxu0 0.0
    %1170 = vmatprep.subr.mxu0 0.0
    %1171 = vmatpush1.msra.mxu0 0.0
    %1172 = vmatprep.subr.mxu0 0.0
    %1173 = vmatpush1.msra.mxu0 0.0
    %1174 = vmatprep.subr.mxu0 0.0
    %1175 = vmatpush1.msra.mxu0 0.0
    %1176 = vmatprep.subr.mxu0 0.0
    %1177 = vmatpush1.msra.mxu0 0.0
    %1178 = vmatprep.subr.mxu0 0.0
    %1179 = vmatpush1.msra.mxu0 0.0
    %1180 = vmatprep.subr.mxu0 0.0
    %1181 = vmatpush1.msra.mxu0 0.0
    %1182 = vmatprep.subr.mxu0 0.0
    %1183 = vmatpush1.msra.mxu0 0.0
    %1184 = vmatprep.subr.mxu0 0.0
    %1185 = vmatpush1.msra.mxu0 0.0
    %1186 = vmatprep.subr.mxu0 0.0
    %1187 = vmatpush1.msra.mxu0 %v1057
    %1188 = vmatprep.subr.mxu0 0.0
    %1189 = vmatpush1.msra.mxu0 %v1056
    %1190 = vmatprep.subr.mxu0 0.0
    %1191 = vmatpush1.msra.mxu0 %v1055
    %1192 = vmatprep.subr.mxu0 0.0
    %1193 = vmatpush1.msra.mxu0 %v1054
    %1194 = vmatprep.subr.mxu0 0.0
    %1195 = vmatpush2.msra.mxu0 0.0
    %1196 = vmatprep.subr.mxu0 0.0
    %1197 = vmatpush2.msra.mxu0 0.0
    %1198 = vmatprep.subr.mxu0 0.0
    %1199 = vmatpush2.msra.mxu0 0.0
    %1200 = vmatprep.subr.mxu0 0.0
    %1201 = vmatpush2.msra.mxu0 0.0
    %1202 = vmatprep.subr.mxu0 0.0
    %1203 = vmatpush2.msra.mxu0 0.0
    %1204 = vmatprep.subr.mxu0 0.0
    %1205 = vmatpush2.msra.mxu0 0.0
    %1206 = vmatprep.subr.mxu0 0.0
    %1207 = vmatpush2.msra.mxu0 0.0
    %1208 = vmatprep.subr.mxu0 0.0
    %1209 = vmatpush2.msra.mxu0 0.0
    %1210 = vmatprep.subr.mxu0 0.0
    %1211 = vmatpush2.msra.mxu0 0.0
    %1212 = vmatprep.subr.mxu0 0.0
    %1213 = vmatpush2.msra.mxu0 0.0
    %1214 = vmatprep.subr.mxu0 0.0
    %1215 = vmatpush2.msra.mxu0 0.0
    %1216 = vmatprep.subr.mxu0 0.0
    %1217 = vmatpush2.msra.mxu0 0.0
    %1218 = vmatprep.subr.mxu0 0.0
    %1219 = vmatpush2.msra.mxu0 0.0
    %1220 = vmatprep.subr.mxu0 0.0
    %1221 = vmatpush2.msra.mxu0 0.0
    %1222 = vmatprep.subr.mxu0 0.0
    %1223 = vmatpush2.msra.mxu0 0.0
    %1224 = vmatprep.subr.mxu0 0.0
    %1225 = vmatpush2.msra.mxu0 0.0
    %1226 = vmatprep.mubr.f32.mxu0 0.0
    %1227 = vmatmul.mubr.f32.gmra.mxu0 %v1160
    %v1228 = vpop.f32.mrf.mxu0
    %v1229 = vadd.f32 %v1156, %v1228
    %v1230 = vpop.f32.mrf.mxu0
    %1231 = vdwg.mxu0
    %vm1232 = vcmp.gt.f32.partialorder %v1229, 0.0
    %v1233 = vmin.f32 %v1229, 0.0
    %v1234 = vmul.f32 %v1233, 1.442695
    %v1235 = vpow.pop %v1234
    %v1236 = vsub.f32 %v1235, 1.0
    %v1237 = vmul.f32 %v1236, 1.6732632
    %v1238 = vsel %vm1232, %v1229, %v1237
    %v1239 = vmul.f32 %v1238, 1.050701
    %v1241 = vlaneseq
    %v1242 = vshrl.u32 %v1241, 7
    %v1243 = vsub.s32 0, %v1242
    %v1244 = vrot.slane %v1063, %v1243
    %v1247 = vsel %vm1158, %v1239, 0
    %1249 = vmatprep.subr.mxu0 0.0
    %1250 = vmatpush1.msra.mxu0 0.0
    %1251 = vmatprep.subr.mxu0 0.0
    %1252 = vmatpush1.msra.mxu0 0.0
    %1253 = vmatprep.subr.mxu0 0.0
    %1254 = vmatpush1.msra.mxu0 0.0
    %1255 = vmatprep.subr.mxu0 0.0
    %1256 = vmatpush1.msra.mxu0 0.0
    %1257 = vmatprep.subr.mxu0 0.0
    %1258 = vmatpush1.msra.mxu0 0.0
    %1259 = vmatprep.subr.mxu0 0.0
    %1260 = vmatpush1.msra.mxu0 0.0
    %1261 = vmatprep.subr.mxu0 0.0
    %1262 = vmatpush1.msra.mxu0 0.0
    %1263 = vmatprep.subr.mxu0 0.0
    %1264 = vmatpush1.msra.mxu0 0.0
    %1265 = vmatprep.subr.mxu0 0.0
    %1266 = vmatpush1.msra.mxu0 0.0
    %1267 = vmatprep.subr.mxu0 0.0
    %1268 = vmatpush1.msra.mxu0 0.0
    %1269 = vmatprep.subr.mxu0 0.0
    %1270 = vmatpush1.msra.mxu0 0.0
    %1271 = vmatprep.subr.mxu0 0.0
    %1272 = vmatpush1.msra.mxu0 0.0
    %1273 = vmatprep.subr.mxu0 0.0
    %1274 = vmatpush1.msra.mxu0 %v1062
    %1275 = vmatprep.subr.mxu0 0.0
    %1276 = vmatpush1.msra.mxu0 %v1061
    %1277 = vmatprep.subr.mxu0 0.0
    %1278 = vmatpush1.msra.mxu0 %v1060
    %1279 = vmatprep.subr.mxu0 0.0
    %1280 = vmatpush1.msra.mxu0 %v1059
    %1281 = vmatprep.subr.mxu0 0.0
    %1282 = vmatpush2.msra.mxu0 0.0
    %1283 = vmatprep.subr.mxu0 0.0
    %1284 = vmatpush2.msra.mxu0 0.0
    %1285 = vmatprep.subr.mxu0 0.0
    %1286 = vmatpush2.msra.mxu0 0.0
    %1287 = vmatprep.subr.mxu0 0.0
    %1288 = vmatpush2.msra.mxu0 0.0
    %1289 = vmatprep.subr.mxu0 0.0
    %1290 = vmatpush2.msra.mxu0 0.0
    %1291 = vmatprep.subr.mxu0 0.0
    %1292 = vmatpush2.msra.mxu0 0.0
    %1293 = vmatprep.subr.mxu0 0.0
    %1294 = vmatpush2.msra.mxu0 0.0
    %1295 = vmatprep.subr.mxu0 0.0
    %1296 = vmatpush2.msra.mxu0 0.0
    %1297 = vmatprep.subr.mxu0 0.0
    %1298 = vmatpush2.msra.mxu0 0.0
    %1299 = vmatprep.subr.mxu0 0.0
    %1300 = vmatpush2.msra.mxu0 0.0
    %1301 = vmatprep.subr.mxu0 0.0
    %1302 = vmatpush2.msra.mxu0 0.0
    %1303 = vmatprep.subr.mxu0 0.0
    %1304 = vmatpush2.msra.mxu0 0.0
    %1305 = vmatprep.subr.mxu0 0.0
    %1306 = vmatpush2.msra.mxu0 0.0
    %1307 = vmatprep.subr.mxu0 0.0
    %1308 = vmatpush2.msra.mxu0 0.0
    %1309 = vmatprep.subr.mxu0 0.0
    %1310 = vmatpush2.msra.mxu0 0.0
    %1311 = vmatprep.subr.mxu0 0.0
    %1312 = vmatpush2.msra.mxu0 0.0
    %1313 = vmatprep.mubr.f32.mxu0 0.0
    %1314 = vmatmul.mubr.f32.gmra.mxu0 %v1247
    %v1315 = vpop.f32.mrf.mxu0
    %v1316 = vadd.f32 %v1244, %v1315
    %v1317 = vpop.f32.mrf.mxu0
    %1318 = vdwg.mxu0
    %vm1319 = vcmp.gt.f32.partialorder %v1316, 0.0
    %v1320 = vmin.f32 %v1316, 0.0
    %v1321 = vmul.f32 %v1320, 1.442695
    %v1322 = vpow.pop %v1321
    %v1323 = vsub.f32 %v1322, 1.0
    %v1324 = vmul.f32 %v1323, 1.6732632
    %v1325 = vsel %vm1319, %v1316, %v1324
    %v1326 = vmul.f32 %v1325, 1.050701
    %1327 = vst.msk [vmem:[#allocation7] sm:$0xff] %vm1158, %v1326
    %v1328 = vld [vmem:[#allocation3] sm:$0xff]
    %v1330 = vsel %vm76, %v1328, 0
    %1332 = vmatprep.subr.mxu0 0.0
    %1333 = vmatpush1.msra.mxu0 0.0
    %1334 = vmatprep.subr.mxu0 0.0
    %1335 = vmatpush1.msra.mxu0 0.0
    %1336 = vmatprep.subr.mxu0 0.0
    %1337 = vmatpush1.msra.mxu0 0.0
    %1338 = vmatprep.subr.mxu0 0.0
    %1339 = vmatpush1.msra.mxu0 0.0
    %1340 = vmatprep.subr.mxu0 0.0
    %1341 = vmatpush1.msra.mxu0 0.0
    %1342 = vmatprep.subr.mxu0 0.0
    %1343 = vmatpush1.msra.mxu0 0.0
    %1344 = vmatprep.subr.mxu0 0.0
    %1345 = vmatpush1.msra.mxu0 0.0
    %1346 = vmatprep.subr.mxu0 0.0
    %1347 = vmatpush1.msra.mxu0 0.0
    %1348 = vmatprep.subr.mxu0 0.0
    %1349 = vmatpush1.msra.mxu0 %v1052
    %1350 = vmatprep.subr.mxu0 0.0
    %1351 = vmatpush1.msra.mxu0 %v1051
    %1352 = vmatprep.subr.mxu0 0.0
    %1353 = vmatpush1.msra.mxu0 %v1050
    %1354 = vmatprep.subr.mxu0 0.0
    %1355 = vmatpush1.msra.mxu0 %v1049
    %1356 = vmatprep.subr.mxu0 0.0
    %1357 = vmatpush1.msra.mxu0 %v1048
    %1358 = vmatprep.subr.mxu0 0.0
    %1359 = vmatpush1.msra.mxu0 %v1047
    %1360 = vmatprep.subr.mxu0 0.0
    %1361 = vmatpush1.msra.mxu0 %v1046
    %1362 = vmatprep.subr.mxu0 0.0
    %1363 = vmatpush1.msra.mxu0 %v1045
    %1364 = vmatprep.subr.mxu0 0.0
    %1365 = vmatpush2.msra.mxu0 0.0
    %1366 = vmatprep.subr.mxu0 0.0
    %1367 = vmatpush2.msra.mxu0 0.0
    %1368 = vmatprep.subr.mxu0 0.0
    %1369 = vmatpush2.msra.mxu0 0.0
    %1370 = vmatprep.subr.mxu0 0.0
    %1371 = vmatpush2.msra.mxu0 0.0
    %1372 = vmatprep.subr.mxu0 0.0
    %1373 = vmatpush2.msra.mxu0 0.0
    %1374 = vmatprep.subr.mxu0 0.0
    %1375 = vmatpush2.msra.mxu0 0.0
    %1376 = vmatprep.subr.mxu0 0.0
    %1377 = vmatpush2.msra.mxu0 0.0
    %1378 = vmatprep.subr.mxu0 0.0
    %1379 = vmatpush2.msra.mxu0 0.0
    %1380 = vmatprep.subr.mxu0 0.0
    %1381 = vmatpush2.msra.mxu0 0.0
    %1382 = vmatprep.subr.mxu0 0.0
    %1383 = vmatpush2.msra.mxu0 0.0
    %1384 = vmatprep.subr.mxu0 0.0
    %1385 = vmatpush2.msra.mxu0 0.0
    %1386 = vmatprep.subr.mxu0 0.0
    %1387 = vmatpush2.msra.mxu0 0.0
    %1388 = vmatprep.subr.mxu0 0.0
    %1389 = vmatpush2.msra.mxu0 0.0
    %1390 = vmatprep.subr.mxu0 0.0
    %1391 = vmatpush2.msra.mxu0 0.0
    %1392 = vmatprep.subr.mxu0 0.0
    %1393 = vmatpush2.msra.mxu0 0.0
    %1394 = vmatprep.subr.mxu0 0.0
    %1395 = vmatpush2.msra.mxu0 0.0
    %1396 = vmatprep.mubr.f32.mxu0 0.0
    %1397 = vmatmul.mubr.f32.gmra.mxu0 %v1330
    %v1398 = vpop.f32.mrf.mxu0
    %v1399 = vadd.f32 %v1069, %v1398
    %v1400 = vpop.f32.mrf.mxu0
    %1401 = vdwg.mxu0
    %vm1402 = vcmp.gt.f32.partialorder %v1399, 0.0
    %v1403 = vmin.f32 %v1399, 0.0
    %v1404 = vmul.f32 %v1403, 1.442695
    %v1405 = vpow.pop %v1404
    %v1406 = vsub.f32 %v1405, 1.0
    %v1407 = vmul.f32 %v1406, 1.6732632
    %v1408 = vsel %vm1402, %v1399, %v1407
    %v1409 = vmul.f32 %v1408, 1.050701
    %v1411 = vsel %vm1158, %v1409, 0
    %1413 = vmatprep.subr.mxu0 0.0
    %1414 = vmatpush1.msra.mxu0 0.0
    %1415 = vmatprep.subr.mxu0 0.0
    %1416 = vmatpush1.msra.mxu0 0.0
    %1417 = vmatprep.subr.mxu0 0.0
    %1418 = vmatpush1.msra.mxu0 0.0
    %1419 = vmatprep.subr.mxu0 0.0
    %1420 = vmatpush1.msra.mxu0 0.0
    %1421 = vmatprep.subr.mxu0 0.0
    %1422 = vmatpush1.msra.mxu0 0.0
    %1423 = vmatprep.subr.mxu0 0.0
    %1424 = vmatpush1.msra.mxu0 0.0
    %1425 = vmatprep.subr.mxu0 0.0
    %1426 = vmatpush1.msra.mxu0 0.0
    %1427 = vmatprep.subr.mxu0 0.0
    %1428 = vmatpush1.msra.mxu0 0.0
    %1429 = vmatprep.subr.mxu0 0.0
    %1430 = vmatpush1.msra.mxu0 0.0
    %1431 = vmatprep.subr.mxu0 0.0
    %1432 = vmatpush1.msra.mxu0 0.0
    %1433 = vmatprep.subr.mxu0 0.0
    %1434 = vmatpush1.msra.mxu0 0.0
    %1435 = vmatprep.subr.mxu0 0.0
    %1436 = vmatpush1.msra.mxu0 0.0
    %1437 = vmatprep.subr.mxu0 0.0
    %1438 = vmatpush1.msra.mxu0 %v1057
    %1439 = vmatprep.subr.mxu0 0.0
    %1440 = vmatpush1.msra.mxu0 %v1056
    %1441 = vmatprep.subr.mxu0 0.0
    %1442 = vmatpush1.msra.mxu0 %v1055
    %1443 = vmatprep.subr.mxu0 0.0
    %1444 = vmatpush1.msra.mxu0 %v1054
    %1445 = vmatprep.subr.mxu0 0.0
    %1446 = vmatpush2.msra.mxu0 0.0
    %1447 = vmatprep.subr.mxu0 0.0
    %1448 = vmatpush2.msra.mxu0 0.0
    %1449 = vmatprep.subr.mxu0 0.0
    %1450 = vmatpush2.msra.mxu0 0.0
    %1451 = vmatprep.subr.mxu0 0.0
    %1452 = vmatpush2.msra.mxu0 0.0
    %1453 = vmatprep.subr.mxu0 0.0
    %1454 = vmatpush2.msra.mxu0 0.0
    %1455 = vmatprep.subr.mxu0 0.0
    %1456 = vmatpush2.msra.mxu0 0.0
    %1457 = vmatprep.subr.mxu0 0.0
    %1458 = vmatpush2.msra.mxu0 0.0
    %1459 = vmatprep.subr.mxu0 0.0
    %1460 = vmatpush2.msra.mxu0 0.0
    %1461 = vmatprep.subr.mxu0 0.0
    %1462 = vmatpush2.msra.mxu0 0.0
    %1463 = vmatprep.subr.mxu0 0.0
    %1464 = vmatpush2.msra.mxu0 0.0
    %1465 = vmatprep.subr.mxu0 0.0
    %1466 = vmatpush2.msra.mxu0 0.0
    %1467 = vmatprep.subr.mxu0 0.0
    %1468 = vmatpush2.msra.mxu0 0.0
    %1469 = vmatprep.subr.mxu0 0.0
    %1470 = vmatpush2.msra.mxu0 0.0
    %1471 = vmatprep.subr.mxu0 0.0
    %1472 = vmatpush2.msra.mxu0 0.0
    %1473 = vmatprep.subr.mxu0 0.0
    %1474 = vmatpush2.msra.mxu0 0.0
    %1475 = vmatprep.subr.mxu0 0.0
    %1476 = vmatpush2.msra.mxu0 0.0
    %1477 = vmatprep.mubr.f32.mxu0 0.0
    %1478 = vmatmul.mubr.f32.gmra.mxu0 %v1411
    %v1479 = vpop.f32.mrf.mxu0
    %v1480 = vadd.f32 %v1156, %v1479
    %v1481 = vpop.f32.mrf.mxu0
    %1482 = vdwg.mxu0
    %vm1483 = vcmp.gt.f32.partialorder %v1480, 0.0
    %v1484 = vmin.f32 %v1480, 0.0
    %v1485 = vmul.f32 %v1484, 1.442695
    %v1486 = vpow.pop %v1485
    %v1487 = vsub.f32 %v1486, 1.0
    %v1488 = vmul.f32 %v1487, 1.6732632
    %v1489 = vsel %vm1483, %v1480, %v1488
    %v1490 = vmul.f32 %v1489, 1.050701
    %v1492 = vsel %vm1158, %v1490, 0
    %1494 = vmatprep.subr.mxu0 0.0
    %1495 = vmatpush1.msra.mxu0 0.0
    %1496 = vmatprep.subr.mxu0 0.0
    %1497 = vmatpush1.msra.mxu0 0.0
    %1498 = vmatprep.subr.mxu0 0.0
    %1499 = vmatpush1.msra.mxu0 0.0
    %1500 = vmatprep.subr.mxu0 0.0
    %1501 = vmatpush1.msra.mxu0 0.0
    %1502 = vmatprep.subr.mxu0 0.0
    %1503 = vmatpush1.msra.mxu0 0.0
    %1504 = vmatprep.subr.mxu0 0.0
    %1505 = vmatpush1.msra.mxu0 0.0
    %1506 = vmatprep.subr.mxu0 0.0
    %1507 = vmatpush1.msra.mxu0 0.0
    %1508 = vmatprep.subr.mxu0 0.0
    %1509 = vmatpush1.msra.mxu0 0.0
    %1510 = vmatprep.subr.mxu0 0.0
    %1511 = vmatpush1.msra.mxu0 0.0
    %1512 = vmatprep.subr.mxu0 0.0
    %1513 = vmatpush1.msra.mxu0 0.0
    %1514 = vmatprep.subr.mxu0 0.0
    %1515 = vmatpush1.msra.mxu0 0.0
    %1516 = vmatprep.subr.mxu0 0.0
    %1517 = vmatpush1.msra.mxu0 0.0
    %1518 = vmatprep.subr.mxu0 0.0
    %1519 = vmatpush1.msra.mxu0 %v1062
    %1520 = vmatprep.subr.mxu0 0.0
    %1521 = vmatpush1.msra.mxu0 %v1061
    %1522 = vmatprep.subr.mxu0 0.0
    %1523 = vmatpush1.msra.mxu0 %v1060
    %1524 = vmatprep.subr.mxu0 0.0
    %1525 = vmatpush1.msra.mxu0 %v1059
    %1526 = vmatprep.subr.mxu0 0.0
    %1527 = vmatpush2.msra.mxu0 0.0
    %1528 = vmatprep.subr.mxu0 0.0
    %1529 = vmatpush2.msra.mxu0 0.0
    %1530 = vmatprep.subr.mxu0 0.0
    %1531 = vmatpush2.msra.mxu0 0.0
    %1532 = vmatprep.subr.mxu0 0.0
    %1533 = vmatpush2.msra.mxu0 0.0
    %1534 = vmatprep.subr.mxu0 0.0
    %1535 = vmatpush2.msra.mxu0 0.0
    %1536 = vmatprep.subr.mxu0 0.0
    %1537 = vmatpush2.msra.mxu0 0.0
    %1538 = vmatprep.subr.mxu0 0.0
    %1539 = vmatpush2.msra.mxu0 0.0
    %1540 = vmatprep.subr.mxu0 0.0
    %1541 = vmatpush2.msra.mxu0 0.0
    %1542 = vmatprep.subr.mxu0 0.0
    %1543 = vmatpush2.msra.mxu0 0.0
    %1544 = vmatprep.subr.mxu0 0.0
    %1545 = vmatpush2.msra.mxu0 0.0
    %1546 = vmatprep.subr.mxu0 0.0
    %1547 = vmatpush2.msra.mxu0 0.0
    %1548 = vmatprep.subr.mxu0 0.0
    %1549 = vmatpush2.msra.mxu0 0.0
    %1550 = vmatprep.subr.mxu0 0.0
    %1551 = vmatpush2.msra.mxu0 0.0
    %1552 = vmatprep.subr.mxu0 0.0
    %1553 = vmatpush2.msra.mxu0 0.0
    %1554 = vmatprep.subr.mxu0 0.0
    %1555 = vmatpush2.msra.mxu0 0.0
    %1556 = vmatprep.subr.mxu0 0.0
    %1557 = vmatpush2.msra.mxu0 0.0
    %1558 = vmatprep.mubr.f32.mxu0 0.0
    %1559 = vmatmul.mubr.f32.gmra.mxu0 %v1492
    %v1560 = vpop.f32.mrf.mxu0
    %v1561 = vadd.f32 %v1244, %v1560
    %v1562 = vpop.f32.mrf.mxu0
    %1563 = vdwg.mxu0
    %vm1564 = vcmp.gt.f32.partialorder %v1561, 0.0
    %v1565 = vmin.f32 %v1561, 0.0
    %v1566 = vmul.f32 %v1565, 1.442695
    %v1567 = vpow.pop %v1566
    %v1568 = vsub.f32 %v1567, 1.0
    %v1569 = vmul.f32 %v1568, 1.6732632
    %v1570 = vsel %vm1564, %v1561, %v1569
    %v1571 = vmul.f32 %v1570, 1.050701
    %s1572 = scalar_lea.vmem [#allocation7], 8
    %1573 = vst.msk [vmem:[%s1572] sm:$0xff] %vm1158, %v1571
    // Predicated region
    $region42: #{gru_decoder_forward.1} parent=1 // pred_check
      _
    $region43: #{gru_decoder_forward.1} parent=1 // pred_check_branch
      %1575 = sbr.rel (0) target = $region45
    $region44: #{gru_decoder_forward.1} parent=1 // pred_region
      %s1577 = ssub.s32 256, 256
      %1578 = vsyncadd [#allocation6], %s1577
      %s1579 = sshll.u32 [#allocation7], 4
      %s1580 = int_to_ptr.vmem [resolvable:$true] %s1579
      %1585 = dma.vmem_to_hbm [thread:$0]  %s1580, 256, %s9, [#allocation6], 128, 128, 8
    $region45: #{gru_decoder_forward.1} parent=1 // pred_fallthru
      _
    // Predicated region
    $region46: #{gru_decoder_forward.1} parent=1 // pred_check
      _
    $region47: #{gru_decoder_forward.1} parent=1 // pred_check_branch
      %1587 = sbr.rel (0) target = $region49
    $region48: #{gru_decoder_forward.1} parent=1 // pred_region
      %1588 = dma.done [#allocation6], 256
    $region49: #{gru_decoder_forward.1} parent=1 // pred_fallthru
      _
    %1589 = vsyncpa [#allocation5], 1
    %1590 = vsyncpa [#allocation6], 1

</llo_original>
